<compile_context>
chip_gen: v7x
topology: tpu7x:2x2x1
jax: 0.10.0
libtpu: 0.0.40
codegen_flags: <defaults>
</compile_context>

<pallas_src>
import functools

import jax
import jax.numpy as jnp
from jax.experimental import pallas as pl
from jax.experimental.pallas import tpu as pltpu


def _srcnn_kernel(xb_ref, xh_ref, w1_ref, b1_ref, w2_ref, b2_ref, w3_ref,
                  b3_ref, o_ref, xf_ref, a2_ref, *, H, W, TH):
    """Fused conv1(9x9,3->64)+ReLU6 -> conv2(1x1,64->32)+ReLU6 -> conv3(5x5,32->3)
    for one (batch, row-tile) grid step.  Channel-major layout (width on lanes).

    xb_ref : (TH, 32, W)     body rows of the width-im2col'd input (k = dx*3+ci)
    xh_ref : (12, 32, W)     the 12 halo rows directly below the body
    w1_ref : (64, 288)       conv1 weights, K index = ky*32 + dx*3 + ci
    w2_ref : (32, 64)        conv2 weights (cout, cin)
    w3_ref : (5, 3, 160)     conv3 weights, (kx, cout, ky*32 + ci)
    o_ref  : (TH, 3, W)      output rows (lane-dense)
    xf_ref : (TH+12, 32, W)  scratch: stitched contiguous input window
    a2_ref : (TH+4, 32, W)   scratch: conv2 output rows (+-2 row halo for conv3)
    """
    f32 = jnp.float32
    He = TH + 4
    Hi = TH + 12
    t = pl.program_id(1)
    r0 = t * TH                                   # first output row of this tile

    # Stitch body + halo into one contiguous window so every 9-row conv1 patch
    # is a free (major-dim) reshape of contiguous 32-channel slabs.
    xf_ref[0:TH] = xb_ref[...]
    xf_ref[TH:Hi] = xh_ref[...]

    # ---- Phase 1: conv1 + ReLU6 + conv2 + ReLU6, one extended row at a time.
    # All 9*9*3 conv1 taps are folded into K=288 => a single MXU matmul per row;
    # the 64-channel intermediate lives only in vregs.
    def phase1(e, carry):
        patch = xf_ref[pl.ds(e, 9)].reshape(9 * 32, W)            # (288, W)
        z1 = jnp.dot(w1_ref[...], patch, preferred_element_type=f32)
        a1 = jnp.clip(z1 + b1_ref[...], 0.0, 6.0)                  # (64, W) f32
        z2 = jnp.dot(w2_ref[...], a1.astype(w2_ref.dtype),
                     preferred_element_type=f32)
        a2 = jnp.clip(z2 + b2_ref[...], 0.0, 6.0)                  # (32, W) f32
        # conv3 must see exact zeros for rows outside the image (its own zero
        # padding), not conv1/conv2 applied to the zero-padded input.
        g = r0 + e - 2                                             # global row
        ok = jnp.logical_and(g >= 0, g < H)
        a2_ref[e] = jnp.where(ok, a2, 0.0).astype(a2_ref.dtype)
        return carry

    jax.lax.fori_loop(0, He, phase1, 0)

    # ---- Phase 2: conv3 (5x5, 32->3).  The 5 vertical taps are folded into
    # K=160 by reading 5 contiguous a2 rows; the 5 horizontal taps become 5
    # matmuls whose (3, W) partials are shifted (zero-filled) and summed.
    zpad = jnp.zeros((3, 2), f32)

    def phase2(r, carry):
        patch3 = a2_ref[pl.ds(r, 5)].reshape(5 * 32, W)            # (160, W)
        acc = jnp.zeros((3, W), f32)
        for dx in range(5):
            p = jnp.dot(w3_ref[dx], patch3, preferred_element_type=f32)
            q = jnp.concatenate([zpad, p, zpad], axis=1)           # (3, W+4)
            acc = acc + q[:, dx:dx + W]
        o_ref[r] = (acc + b3_ref[...]).astype(o_ref.dtype)         # (3, W) row
        return carry

    jax.lax.fori_loop(0, TH, phase2, 0)


def _vmem_capacity_bytes():
    try:
        return int(pltpu.get_tpu_info().vmem_capacity_bytes)
    except Exception:
        return 64 << 20                                            # v7x floor


def _vmem_bytes(TH, W, in_item):
    """Rough per-grid-step VMEM footprint of the kernel."""
    x_bufs = 2 * (TH + 12) * 32 * W * in_item          # body + halo, double buf
    scratch = ((TH + 12) + (TH + 4)) * 32 * W * in_item  # xf + a2 scratch
    out_bufs = 2 * TH * 8 * W * 4                      # (TH, 3->8, W) double buf
    return x_bufs + scratch + out_bufs + (2 << 20)     # weights + headroom


def _pick_tile_h(H, W, in_item):
    budget = int(0.4 * _vmem_capacity_bytes())
    cands = [d for d in range(H, 0, -1)
             if H % d == 0 and (d % 8 == 0 or d == H)]
    for d in cands:
        if _vmem_bytes(d, W, in_item) <= budget:
            return d
    return cands[-1]


def srcnn_forward(params, x_nchw, *, tile_h=None, compute_dtype=jnp.float32):
    """SRCNN forward matching the PyTorch module (NCHW in, NCHW out)."""
    N, C, H, W = x_nchw.shape
    assert C == 3
    f32 = jnp.float32
    cdt = compute_dtype
    in_item = jnp.dtype(cdt).itemsize

    TH = _pick_tile_h(H, W, in_item) if tile_h is None else tile_h
    assert H % TH == 0 and (TH % 8 == 0 or TH == H), (H, TH)
    nT = H // TH

    x = jnp.transpose(x_nchw, (0, 2, 3, 1)).astype(f32)            # NHWC
    # rows: pad 6 = conv1 pad (4) + conv3 halo (2); cols: pad 4 = conv1 pad.
    xp = jnp.pad(x, ((0, 0), (6, 6), (4, 4), (0, 0)))
    # Width im2col for conv1, channel-major row slabs: channel k = dx*3 + ci
    # (27 real channels, zero-padded to 32 so 9 contiguous row slabs merge into
    # a dense K=288 matmul operand with no in-kernel relayout).
    cols = jnp.stack([xp[:, :, dx:dx + W, :] for dx in range(9)], axis=3)
    xcolT = jnp.transpose(cols, (0, 1, 3, 4, 2)).reshape(N, H + 12, 27, W)
    xcolT = jnp.pad(xcolT, ((0, 0), (0, 0), (0, 5), (0, 0))).astype(cdt)
    xbody = xcolT[:, :H]                                           # (N, H, 32, W)
    xhalo = jnp.stack(
        [xcolT[:, (t + 1) * TH:(t + 1) * TH + 12] for t in range(nT)],
        axis=1)                                                    # (N, nT, 12, 32, W)

    # Weights in channel-major ("output channels on sublanes") form.
    w1 = jnp.transpose(params["w1"], (3, 0, 1, 2)).reshape(64, 9, 27)
    w1 = jnp.pad(w1, ((0, 0), (0, 0), (0, 5))).reshape(64, 288).astype(cdt)
    w2 = params["w2"].reshape(64, 32).T.astype(cdt)                # (32, 64)
    w3 = jnp.transpose(params["w3"], (1, 3, 0, 2)).reshape(5, 3, 160).astype(cdt)
    b1 = params["b1"].reshape(64, 1).astype(f32)
    b2 = params["b2"].reshape(32, 1).astype(f32)
    b3 = params["b3"].reshape(3, 1).astype(f32)

    kernel = functools.partial(_srcnn_kernel, H=H, W=W, TH=TH)
    vmem_limit = int(min(0.9 * _vmem_capacity_bytes(),
                         max(2 * _vmem_bytes(TH, W, in_item), 32 << 20)))

    out_nh3w = pl.pallas_call(
        kernel,
        out_shape=jax.ShapeDtypeStruct((N, H, 3, W), x_nchw.dtype),
        grid_spec=pltpu.PrefetchScalarGridSpec(
            num_scalar_prefetch=0,
            grid=(N, nT),
            in_specs=[
                pl.BlockSpec((None, TH, 32, W), lambda n, t: (n, t, 0, 0)),
                pl.BlockSpec((None, None, 12, 32, W),
                             lambda n, t: (n, t, 0, 0, 0)),
                pl.BlockSpec((64, 288), lambda n, t: (0, 0)),
                pl.BlockSpec((64, 1), lambda n, t: (0, 0)),
                pl.BlockSpec((32, 64), lambda n, t: (0, 0)),
                pl.BlockSpec((32, 1), lambda n, t: (0, 0)),
                pl.BlockSpec((5, 3, 160), lambda n, t: (0, 0, 0)),
                pl.BlockSpec((3, 1), lambda n, t: (0, 0)),
            ],
            out_specs=pl.BlockSpec((None, TH, 3, W), lambda n, t: (n, t, 0, 0)),
            scratch_shapes=[
                pltpu.VMEM((TH + 12, 32, W), cdt),   # stitched input window
                pltpu.VMEM((TH + 4, 32, W), cdt),    # conv2 output rows
            ],
        ),
        compiler_params=pltpu.CompilerParams(
            dimension_semantics=("parallel", "parallel"),
            vmem_limit_bytes=vmem_limit),
    )(xbody, xhalo, w1, b1, w2, b2, w3, b3)

    return jnp.transpose(out_nh3w, (0, 2, 1, 3))                   # NCHW


def init_srcnn_params(key, dtype=jnp.float32):
    """Deterministic synthetic parameters matching the nn.Module shapes (HWIO)."""
    ks = jax.random.split(key, 6)

    def conv_params(kw, kb, K, cin, cout):
        fan_in = cin * K * K
        scale = 1.0 / jnp.sqrt(jnp.asarray(fan_in, jnp.float32))
        w = (jax.random.normal(kw, (K, K, cin, cout), jnp.float32)
             * scale).astype(dtype)
        b = (jax.random.normal(kb, (cout,), jnp.float32) * scale).astype(dtype)
        return w, b

    w1, b1 = conv_params(ks[0], ks[1], 9, 3, 64)   # conv1: 3 -> 64, k9, p4
    w2, b2 = conv_params(ks[2], ks[3], 1, 64, 32)  # conv2: 64 -> 32, k1, p0
    w3, b3 = conv_params(ks[4], ks[5], 5, 32, 3)   # conv3: 32 -> 3,  k5, p2
    return dict(w1=w1, b1=b1, w2=w2, b2=b2, w3=w3, b3=b3)


def srcnn_reference(params, x_nchw):
    """Pure-JAX reference using lax.conv for correctness checking."""
    x = jnp.transpose(x_nchw, (0, 2, 3, 1))
    dn = ("NHWC", "HWIO", "NHWC")

    def conv(x, w, b, pad):
        y = jax.lax.conv_general_dilated(
            x, w, window_strides=(1, 1),
            padding=((pad, pad), (pad, pad)),
            dimension_numbers=dn)
        return y + b

    y = jnp.clip(conv(x, params["w1"], params["b1"], 4), 0.0, 6.0)
    y = jnp.clip(conv(y, params["w2"], params["b2"], 0), 0.0, 6.0)
    y = conv(y, params["w3"], params["b3"], 2)
    return jnp.transpose(y, (0, 3, 1, 2))


if __name__ == "__main__":
    key = jax.random.PRNGKey(0)
    k_param, k_x = jax.random.split(key)

    params = init_srcnn_params(k_param)
    x = jax.random.normal(k_x, (2, 3, 16, 16), jnp.float32)        # NCHW

    ref = jax.block_until_ready(srcnn_reference(params, x))

    # Multi row-tile path (exercises the 12-row halo stitch and the first/last
    # tile zero-row masking for conv3), f32 matmul operands.
    fwd_tiled = jax.jit(functools.partial(srcnn_forward, tile_h=8))
    out = jax.block_until_ready(fwd_tiled(params, x))
    assert out.shape == (2, 3, 16, 16), out.shape
    err = float(jnp.max(jnp.abs(out - ref)))
    assert jnp.allclose(out, ref, atol=5e-3, rtol=5e-3), err

    # Single-tile path with automatic (VMEM-aware) tile selection.
    fwd_single = jax.jit(srcnn_forward)
    out2 = jax.block_until_ready(fwd_single(params, x))
    err2 = float(jnp.max(jnp.abs(out2 - ref)))
    assert jnp.allclose(out2, ref, atol=5e-3, rtol=5e-3), err2

    # bf16 matmul operands (f32 accumulation / bias / clip stay f32): looser
    # tolerance purely due to operand rounding.
    fwd_bf16 = jax.jit(functools.partial(srcnn_forward, tile_h=8,
                                         compute_dtype=jnp.bfloat16))
    out3 = jax.block_until_ready(fwd_bf16(params, x))
    err3 = float(jnp.max(jnp.abs(out3 - ref)))
    assert jnp.allclose(out3, ref, atol=1.5e-1, rtol=1.5e-1), err3

    print("KERNEL_OK")
</pallas_src>

<mosaic_0001>
module attributes {stable_mosaic.version = 11 : i64} {
  func.func @_srcnn_kernel(%arg0: i32, %arg1: i32, %arg2: memref<1x8x32x16xf32, #tpu.memory_space<vmem>>, %arg3: memref<1x1x12x32x16xf32, #tpu.memory_space<vmem>>, %arg4: memref<64x288xf32, #tpu.memory_space<vmem>>, %arg5: memref<64x1xf32, #tpu.memory_space<vmem>>, %arg6: memref<32x64xf32, #tpu.memory_space<vmem>>, %arg7: memref<32x1xf32, #tpu.memory_space<vmem>>, %arg8: memref<5x3x160xf32, #tpu.memory_space<vmem>>, %arg9: memref<3x1xf32, #tpu.memory_space<vmem>>, %arg10: memref<1x8x3x16xf32, #tpu.memory_space<vmem>>, %arg11: memref<20x32x16xf32, #tpu.memory_space<vmem>>, %arg12: memref<12x32x16xf32, #tpu.memory_space<vmem>>) attributes {dimension_semantics = [#tpu.dimension_semantics<parallel>, #tpu.dimension_semantics<parallel>], iteration_bounds = array<i64: 2, 2>, scalar_prefetch = 0 : i64, scratch_operands = 2 : i64, tpu.core_type = #tpu.core_type<tc>, window_params = [{transform_indices = @transform_0, window_bounds = array<i64: 1, 8, 32, 16>}, {transform_indices = @transform_1, window_bounds = array<i64: 1, 1, 12, 32, 16>}, {pipeline_mode = #tpu.pipeline_mode<synchronous>, transform_indices = @transform_2, window_bounds = array<i64: 64, 288>}, {pipeline_mode = #tpu.pipeline_mode<synchronous>, transform_indices = @transform_3, window_bounds = array<i64: 64, 1>}, {pipeline_mode = #tpu.pipeline_mode<synchronous>, transform_indices = @transform_4, window_bounds = array<i64: 32, 64>}, {pipeline_mode = #tpu.pipeline_mode<synchronous>, transform_indices = @transform_5, window_bounds = array<i64: 32, 1>}, {pipeline_mode = #tpu.pipeline_mode<synchronous>, transform_indices = @transform_6, window_bounds = array<i64: 5, 3, 160>}, {pipeline_mode = #tpu.pipeline_mode<synchronous>, transform_indices = @transform_7, window_bounds = array<i64: 3, 1>}, {transform_indices = @transform_8, window_bounds = array<i64: 1, 8, 3, 16>}]} {
    %c8_i32 = arith.constant 8 : i32
    %0 = arith.muli %arg1, %c8_i32 : i32
    %c0 = arith.constant 0 : index
    %c0_0 = arith.constant 0 : index
    %c0_1 = arith.constant 0 : index
    %c0_2 = arith.constant 0 : index
    %1 = vector.load %arg2[%c0, %c0_0, %c0_1, %c0_2] : memref<1x8x32x16xf32, #tpu.memory_space<vmem>>, vector<1x8x32x16xf32>
    %2 = vector.shape_cast %1 : vector<1x8x32x16xf32> to vector<8x32x16xf32>
    %c0_3 = arith.constant 0 : index
    %c0_4 = arith.constant 0 : index
    %c0_5 = arith.constant 0 : index
    %3 = vector.load %arg11[%c0_3, %c0_4, %c0_5] : memref<20x32x16xf32, #tpu.memory_space<vmem>>, vector<8x32x16xf32>
    tpu.vector_store %arg11[%c0_3, %c0_4, %c0_5], %2 {strides = array<i32>} : memref<20x32x16xf32, #tpu.memory_space<vmem>>, vector<8x32x16xf32>,
    %c0_6 = arith.constant 0 : index
    %c0_7 = arith.constant 0 : index
    %c0_8 = arith.constant 0 : index
    %c0_9 = arith.constant 0 : index
    %c0_10 = arith.constant 0 : index
    %4 = vector.load %arg3[%c0_6, %c0_7, %c0_8, %c0_9, %c0_10] : memref<1x1x12x32x16xf32, #tpu.memory_space<vmem>>, vector<1x1x12x32x16xf32>
    %5 = vector.shape_cast %4 : vector<1x1x12x32x16xf32> to vector<12x32x16xf32>
    %c8 = arith.constant 8 : index
    %c0_11 = arith.constant 0 : index
    %c0_12 = arith.constant 0 : index
    %6 = vector.load %arg11[%c8, %c0_11, %c0_12] : memref<20x32x16xf32, #tpu.memory_space<vmem>>, vector<12x32x16xf32>
    tpu.vector_store %arg11[%c8, %c0_11, %c0_12], %5 {strides = array<i32>} : memref<20x32x16xf32, #tpu.memory_space<vmem>>, vector<12x32x16xf32>,
    %c0_i32 = arith.constant 0 : i32
    %c12_i32 = arith.constant 12 : i32
    %7 = arith.addi %c0_i32, %c12_i32 : i32
    %c1_i32 = arith.constant 1 : i32
    scf.for %arg13 = %c0_i32 to %7 step %c1_i32  : i32 {
      %10 = arith.index_cast %arg13 : i32 to index
      %c0_18 = arith.constant 0 : index
      %c0_19 = arith.constant 0 : index
      %11 = vector.load %arg11[%10, %c0_18, %c0_19] : memref<20x32x16xf32, #tpu.memory_space<vmem>>, vector<9x32x16xf32>
      %12 = vector.shape_cast %11 : vector<9x32x16xf32> to vector<288x16xf32>
      %c0_20 = arith.constant 0 : index
      %c0_21 = arith.constant 0 : index
      %13 = vector.load %arg4[%c0_20, %c0_21] : memref<64x288xf32, #tpu.memory_space<vmem>>, vector<64x288xf32>
      %cst_22 = arith.constant dense<0.000000e+00> : vector<64x16xf32>
      %14 = tpu.matmul %13, %12, %cst_22 {dimension_numbers = #tpu.dot_dimension_numbers<[1], [0], [0], [1], [0, 0, 1, 1], [], []>} : vector<64x288xf32>, vector<288x16xf32>, vector<64x16xf32> -> vector<64x16xf32>
      %c0_23 = arith.constant 0 : index
      %c0_24 = arith.constant 0 : index
      %15 = vector.load %arg5[%c0_23, %c0_24] : memref<64x1xf32, #tpu.memory_space<vmem>>, vector<64x1xf32>
      %16 = vector.broadcast %15 : vector<64x1xf32> to vector<64x16xf32>
      %17 = arith.addf %14, %16 : vector<64x16xf32>
      %cst_25 = arith.constant 0.000000e+00 : f32
      %cst_26 = arith.constant 6.000000e+00 : f32
      %18 = vector.broadcast %cst_25 : f32 to vector<64x16xf32>
      %19 = arith.maximumf %18, %17 : vector<64x16xf32>
      %20 = vector.broadcast %cst_26 : f32 to vector<64x16xf32>
      %21 = arith.minimumf %20, %19 : vector<64x16xf32>
      %c0_27 = arith.constant 0 : index
      %c0_28 = arith.constant 0 : index
      %22 = vector.load %arg6[%c0_27, %c0_28] : memref<32x64xf32, #tpu.memory_space<vmem>>, vector<32x64xf32>
      %cst_29 = arith.constant dense<0.000000e+00> : vector<32x16xf32>
      %23 = tpu.matmul %22, %21, %cst_29 {dimension_numbers = #tpu.dot_dimension_numbers<[1], [0], [0], [1], [0, 0, 1, 1], [], []>} : vector<32x64xf32>, vector<64x16xf32>, vector<32x16xf32> -> vector<32x16xf32>
      %c0_30 = arith.constant 0 : index
      %c0_31 = arith.constant 0 : index
      %24 = vector.load %arg7[%c0_30, %c0_31] : memref<32x1xf32, #tpu.memory_space<vmem>>, vector<32x1xf32>
      %25 = vector.broadcast %24 : vector<32x1xf32> to vector<32x16xf32>
      %26 = arith.addf %23, %25 : vector<32x16xf32>
      %cst_32 = arith.constant 0.000000e+00 : f32
      %cst_33 = arith.constant 6.000000e+00 : f32
      %27 = vector.broadcast %cst_32 : f32 to vector<32x16xf32>
      %28 = arith.maximumf %27, %26 : vector<32x16xf32>
      %29 = vector.broadcast %cst_33 : f32 to vector<32x16xf32>
      %30 = arith.minimumf %29, %28 : vector<32x16xf32>
      %31 = arith.addi %0, %arg13 : i32
      %c2_i32 = arith.constant 2 : i32
      %32 = arith.subi %31, %c2_i32 : i32
      %c0_i32_34 = arith.constant 0 : i32
      %33 = arith.cmpi sge, %32, %c0_i32_34 : i32
      %c16_i32 = arith.constant 16 : i32
      %34 = arith.cmpi slt, %32, %c16_i32 : i32
      %35 = arith.andi %33, %34 : i1
      %cst_35 = arith.constant 0.000000e+00 : f32
      %36 = vector.broadcast %cst_35 : f32 to vector<32x16xf32>
      %37 = arith.select %35, %30, %36 : vector<32x16xf32>
      %38 = arith.index_cast %arg13 : i32 to index
      %c0_36 = arith.constant 0 : index
      %c0_37 = arith.constant 0 : index
      %39 = vector.load %arg12[%38, %c0_36, %c0_37] : memref<12x32x16xf32, #tpu.memory_space<vmem>>, vector<1x32x16xf32>
      %40 = vector.shape_cast %39 : vector<1x32x16xf32> to vector<32x16xf32>
      %41 = vector.shape_cast %37 : vector<32x16xf32> to vector<1x32x16xf32>
      tpu.vector_store %arg12[%38, %c0_36, %c0_37], %41 {strides = array<i32>} : memref<12x32x16xf32, #tpu.memory_space<vmem>>, vector<1x32x16xf32>,
    }
    %c12_i32_13 = arith.constant 12 : i32
    %cst = arith.constant 0.000000e+00 : f32
    %8 = vector.broadcast %cst : f32 to vector<3x2xf32>
    %c0_i32_14 = arith.constant 0 : i32
    %c8_i32_15 = arith.constant 8 : i32
    %9 = arith.addi %c0_i32_14, %c8_i32_15 : i32
    %c1_i32_16 = arith.constant 1 : i32
    scf.for %arg13 = %c0_i32_14 to %9 step %c1_i32_16  : i32 {
      %10 = arith.index_cast %arg13 : i32 to index
      %c0_18 = arith.constant 0 : index
      %c0_19 = arith.constant 0 : index
      %11 = vector.load %arg12[%10, %c0_18, %c0_19] : memref<12x32x16xf32, #tpu.memory_space<vmem>>, vector<5x32x16xf32>
      %12 = vector.shape_cast %11 : vector<5x32x16xf32> to vector<160x16xf32>
      %cst_20 = arith.constant 0.000000e+00 : f32
      %13 = vector.broadcast %cst_20 : f32 to vector<3x16xf32>
      %c0_21 = arith.constant 0 : index
      %c0_22 = arith.constant 0 : index
      %c0_23 = arith.constant 0 : index
      %14 = vector.load %arg8[%c0_21, %c0_22, %c0_23] : memref<5x3x160xf32, #tpu.memory_space<vmem>>, vector<1x3x160xf32>
      %15 = vector.shape_cast %14 : vector<1x3x160xf32> to vector<3x160xf32>
      %cst_24 = arith.constant dense<0.000000e+00> : vector<3x16xf32>
      %16 = tpu.matmul %15, %12, %cst_24 {dimension_numbers = #tpu.dot_dimension_numbers<[1], [0], [0], [1], [0, 0, 1, 1], [], []>} : vector<3x160xf32>, vector<160x16xf32>, vector<3x16xf32> -> vector<3x16xf32>
      %17 = tpu.concatenate %8, %16, %8 in 1 : vector<3x2xf32>, vector<3x16xf32>, vector<3x2xf32> -> vector<3x20xf32>
      %18 = vector.extract_strided_slice %17 {offsets = [0, 0], sizes = [3, 16], strides = [1, 1]} : vector<3x20xf32> to vector<3x16xf32>
      %19 = arith.addf %13, %18 : vector<3x16xf32>
      %c1 = arith.constant 1 : index
      %c0_25 = arith.constant 0 : index
      %c0_26 = arith.constant 0 : index
      %20 = vector.load %arg8[%c1, %c0_25, %c0_26] : memref<5x3x160xf32, #tpu.memory_space<vmem>>, vector<1x3x160xf32>
      %21 = vector.shape_cast %20 : vector<1x3x160xf32> to vector<3x160xf32>
      %cst_27 = arith.constant dense<0.000000e+00> : vector<3x16xf32>
      %22 = tpu.matmul %21, %12, %cst_27 {dimension_numbers = #tpu.dot_dimension_numbers<[1], [0], [0], [1], [0, 0, 1, 1], [], []>} : vector<3x160xf32>, vector<160x16xf32>, vector<3x16xf32> -> vector<3x16xf32>
      %23 = tpu.concatenate %8, %22, %8 in 1 : vector<3x2xf32>, vector<3x16xf32>, vector<3x2xf32> -> vector<3x20xf32>
      %24 = vector.extract_strided_slice %23 {offsets = [0, 1], sizes = [3, 16], strides = [1, 1]} : vector<3x20xf32> to vector<3x16xf32>
      %25 = arith.addf %19, %24 : vector<3x16xf32>
      %c2 = arith.constant 2 : index
      %c0_28 = arith.constant 0 : index
      %c0_29 = arith.constant 0 : index
      %26 = vector.load %arg8[%c2, %c0_28, %c0_29] : memref<5x3x160xf32, #tpu.memory_space<vmem>>, vector<1x3x160xf32>
      %27 = vector.shape_cast %26 : vector<1x3x160xf32> to vector<3x160xf32>
      %cst_30 = arith.constant dense<0.000000e+00> : vector<3x16xf32>
      %28 = tpu.matmul %27, %12, %cst_30 {dimension_numbers = #tpu.dot_dimension_numbers<[1], [0], [0], [1], [0, 0, 1, 1], [], []>} : vector<3x160xf32>, vector<160x16xf32>, vector<3x16xf32> -> vector<3x16xf32>
      %29 = tpu.concatenate %8, %28, %8 in 1 : vector<3x2xf32>, vector<3x16xf32>, vector<3x2xf32> -> vector<3x20xf32>
      %30 = vector.extract_strided_slice %29 {offsets = [0, 2], sizes = [3, 16], strides = [1, 1]} : vector<3x20xf32> to vector<3x16xf32>
      %31 = arith.addf %25, %30 : vector<3x16xf32>
      %c3 = arith.constant 3 : index
      %c0_31 = arith.constant 0 : index
      %c0_32 = arith.constant 0 : index
      %32 = vector.load %arg8[%c3, %c0_31, %c0_32] : memref<5x3x160xf32, #tpu.memory_space<vmem>>, vector<1x3x160xf32>
      %33 = vector.shape_cast %32 : vector<1x3x160xf32> to vector<3x160xf32>
      %cst_33 = arith.constant dense<0.000000e+00> : vector<3x16xf32>
      %34 = tpu.matmul %33, %12, %cst_33 {dimension_numbers = #tpu.dot_dimension_numbers<[1], [0], [0], [1], [0, 0, 1, 1], [], []>} : vector<3x160xf32>, vector<160x16xf32>, vector<3x16xf32> -> vector<3x16xf32>
      %35 = tpu.concatenate %8, %34, %8 in 1 : vector<3x2xf32>, vector<3x16xf32>, vector<3x2xf32> -> vector<3x20xf32>
      %36 = vector.extract_strided_slice %35 {offsets = [0, 3], sizes = [3, 16], strides = [1, 1]} : vector<3x20xf32> to vector<3x16xf32>
      %37 = arith.addf %31, %36 : vector<3x16xf32>
      %c4 = arith.constant 4 : index
      %c0_34 = arith.constant 0 : index
      %c0_35 = arith.constant 0 : index
      %38 = vector.load %arg8[%c4, %c0_34, %c0_35] : memref<5x3x160xf32, #tpu.memory_space<vmem>>, vector<1x3x160xf32>
      %39 = vector.shape_cast %38 : vector<1x3x160xf32> to vector<3x160xf32>
      %cst_36 = arith.constant dense<0.000000e+00> : vector<3x16xf32>
      %40 = tpu.matmul %39, %12, %cst_36 {dimension_numbers = #tpu.dot_dimension_numbers<[1], [0], [0], [1], [0, 0, 1, 1], [], []>} : vector<3x160xf32>, vector<160x16xf32>, vector<3x16xf32> -> vector<3x16xf32>
      %41 = tpu.concatenate %8, %40, %8 in 1 : vector<3x2xf32>, vector<3x16xf32>, vector<3x2xf32> -> vector<3x20xf32>
      %42 = vector.extract_strided_slice %41 {offsets = [0, 4], sizes = [3, 16], strides = [1, 1]} : vector<3x20xf32> to vector<3x16xf32>
      %43 = arith.addf %37, %42 : vector<3x16xf32>
      %c0_37 = arith.constant 0 : index
      %c0_38 = arith.constant 0 : index
      %44 = vector.load %arg9[%c0_37, %c0_38] : memref<3x1xf32, #tpu.memory_space<vmem>>, vector<3x1xf32>
      %45 = vector.broadcast %44 : vector<3x1xf32> to vector<3x16xf32>
      %46 = arith.addf %43, %45 : vector<3x16xf32>
      %c0_39 = arith.constant 0 : index
      %47 = arith.index_cast %arg13 : i32 to index
      %c0_40 = arith.constant 0 : index
      %c0_41 = arith.constant 0 : index
      %48 = vector.load %arg10[%c0_39, %47, %c0_40, %c0_41] : memref<1x8x3x16xf32, #tpu.memory_space<vmem>>, vector<1x1x3x16xf32>
      %49 = vector.shape_cast %48 : vector<1x1x3x16xf32> to vector<3x16xf32>
      %50 = vector.shape_cast %46 : vector<3x16xf32> to vector<1x1x3x16xf32>
      tpu.vector_store %arg10[%c0_39, %47, %c0_40, %c0_41], %50 {strides = array<i32>} : memref<1x8x3x16xf32, #tpu.memory_space<vmem>>, vector<1x1x3x16xf32>,
    }
    %c8_i32_17 = arith.constant 8 : i32
    return
  }
  func.func @transform_0(%arg0: i32, %arg1: i32) -> (i32, i32, i32, i32) {
    %c0_i32 = arith.constant 0 : i32
    %c0_i32_0 = arith.constant 0 : i32
    %c0_i32_1 = arith.constant 0 : i32
    return %arg0, %arg1, %c0_i32, %c0_i32_0 : i32, i32, i32, i32
  }
  func.func @transform_1(%arg0: i32, %arg1: i32) -> (i32, i32, i32, i32, i32) {
    %c0_i32 = arith.constant 0 : i32
    %c0_i32_0 = arith.constant 0 : i32
    %c0_i32_1 = arith.constant 0 : i32
    %c0_i32_2 = arith.constant 0 : i32
    return %arg0, %arg1, %c0_i32, %c0_i32_0, %c0_i32_1 : i32, i32, i32, i32, i32
  }
  func.func @transform_2(%arg0: i32, %arg1: i32) -> (i32, i32) {
    %c0_i32 = arith.constant 0 : i32
    %c0_i32_0 = arith.constant 0 : i32
    %c0_i32_1 = arith.constant 0 : i32
    return %c0_i32, %c0_i32_0 : i32, i32
  }
  func.func @transform_3(%arg0: i32, %arg1: i32) -> (i32, i32) {
    %c0_i32 = arith.constant 0 : i32
    %c0_i32_0 = arith.constant 0 : i32
    %c0_i32_1 = arith.constant 0 : i32
    return %c0_i32, %c0_i32_0 : i32, i32
  }
  func.func @transform_4(%arg0: i32, %arg1: i32) -> (i32, i32) {
    %c0_i32 = arith.constant 0 : i32
    %c0_i32_0 = arith.constant 0 : i32
    %c0_i32_1 = arith.constant 0 : i32
    return %c0_i32, %c0_i32_0 : i32, i32
  }
  func.func @transform_5(%arg0: i32, %arg1: i32) -> (i32, i32) {
    %c0_i32 = arith.constant 0 : i32
    %c0_i32_0 = arith.constant 0 : i32
    %c0_i32_1 = arith.constant 0 : i32
    return %c0_i32, %c0_i32_0 : i32, i32
  }
  func.func @transform_6(%arg0: i32, %arg1: i32) -> (i32, i32, i32) {
    %c0_i32 = arith.constant 0 : i32
    %c0_i32_0 = arith.constant 0 : i32
    %c0_i32_1 = arith.constant 0 : i32
    %c0_i32_2 = arith.constant 0 : i32
    return %c0_i32, %c0_i32_0, %c0_i32_1 : i32, i32, i32
  }
  func.func @transform_7(%arg0: i32, %arg1: i32) -> (i32, i32) {
    %c0_i32 = arith.constant 0 : i32
    %c0_i32_0 = arith.constant 0 : i32
    %c0_i32_1 = arith.constant 0 : i32
    return %c0_i32, %c0_i32_0 : i32, i32
  }
  func.func @transform_8(%arg0: i32, %arg1: i32) -> (i32, i32, i32, i32) {
    %c0_i32 = arith.constant 0 : i32
    %c0_i32_0 = arith.constant 0 : i32
    %c0_i32_1 = arith.constant 0 : i32
    return %arg0, %arg1, %c0_i32, %c0_i32_0 : i32, i32, i32, i32
  }
}

</mosaic_0001>

<llo_original>
// kernel: srcnn_forward.1
$region0: #{srcnn_forward.1}
  #allocation0 [shape = 'u32[]', space=smem, size = 0x4, offset = 0x4, fixed_abs, tag = 'smem constant byte address 0x4 - core index']
  #allocation1 [shape = 'u32[144,128]{1,0:T(1,128)}', space=vmem, size = 0x12000, scoped, tag = 'internal scratch']
  #allocation2 [shape = 'f32[20,32,16]{2,1,0:T(8,128)}', space=vmem, size = 0x50000, scoped, tag = 'scratch operand']
  #allocation3 [shape = 'f32[12,32,16]{2,1,0:T(8,128)}', space=vmem, size = 0x30000, scoped, tag = 'scratch operand']
  %s0 = inlined_call_operand.vmem [shape: f32[2,16,32,16], index: 0, kind: input, shape index: {}]
  %s1 = inlined_call_operand.vmem [shape: f32[2,2,12,32,16], index: 1, kind: input, shape index: {}]
  %s2 = inlined_call_operand.vmem [shape: f32[64,288], index: 2, kind: input, shape index: {}]
  %s3 = inlined_call_operand.vmem [shape: f32[64,1], index: 3, kind: input, shape index: {}]
  %s4 = inlined_call_operand.vmem [shape: f32[32,64], index: 4, kind: input, shape index: {}]
  %s5 = inlined_call_operand.vmem [shape: f32[32,1], index: 5, kind: input, shape index: {}]
  %s6 = inlined_call_operand.vmem [shape: f32[5,3,160], index: 6, kind: input, shape index: {}]
  %s7 = inlined_call_operand.vmem [shape: f32[3,1], index: 7, kind: input, shape index: {}]
  %s8 = inlined_call_operand.vmem [shape: f32[2,16,3,16], index: 8, kind: output, shape index: {}]
  %s9 = sld [smem:[#allocation0]]
  $region79: #{srcnn_forward.1} parent=0
    _
  %s11 = ssub.s32 1, %s9
  %s12 = scalar_select 0, %s11, %s9
  loop: start=0, step=1, limit=6
  $region2: #{srcnn_forward.1} parent=0 // loop_pre_header
    _
  $region3: #{srcnn_forward.1} parent=0 // loop_header
    %s14 = sphi 0, %s18
    %p15 = scmp.ge.s32.totalorder %s14, 6
    %s21 = sphi 0, %s33
    %s22 = sphi 0, %s29
    %s23 = sphi 0, %s21
    %s24 = sphi 0, %s22
    %s25 = sphi 0, %s23
    %s26 = sphi 0, %s24
    %s38 = sphi 0, %s40
    %s41 = sphi 0, %s38
    %s42 = sphi 0, %s41
    %s58 = sphi 0, %s42
    %s66 = sphi 0, %s68
    %s69 = sphi 0, %s66
    %s70 = sphi 0, %s69
    %s86 = sphi 0, %s70
    %s90 = sphi 0, %s90
    %s92 = sphi 0, %s90
    %s93 = sphi 0, %s92
    %s107 = sphi 0, %s93
    %s111 = sphi 0, %s111
    %s113 = sphi 0, %s111
    %s114 = sphi 0, %s113
    %s128 = sphi 0, %s114
    %s132 = sphi 0, %s132
    %s134 = sphi 0, %s132
    %s135 = sphi 0, %s134
    %s149 = sphi 0, %s135
    %s153 = sphi 0, %s153
    %s155 = sphi 0, %s153
    %s156 = sphi 0, %s155
    %s170 = sphi 0, %s156
    %s174 = sphi 0, %s174
    %s176 = sphi 0, %s174
    %s177 = sphi 0, %s176
    %s191 = sphi 0, %s177
    %s195 = sphi 0, %s195
    %s197 = sphi 0, %s195
    %s198 = sphi 0, %s197
    %s212 = sphi 0, %s198
    %s220 = sphi 0, %s222
    %s223 = sphi 0, %s220
    %s224 = sphi 0, %s223
    %s240 = sphi 0, %s224
  $region4: #{srcnn_forward.1} parent=0 // loop_header_branch
    %17 = sbr.rel (%p15) target = $region8
  $region5: #{srcnn_forward.1} parent=0 // loop_body
    %s19 = ssub.s32 %s14, 1
    %s20 = ssub.s32 %s14, 2
    %s27 = sadd.s32 1, %s22
    %p28 = scmp.ge.s32.totalorder %s27, 2
    %s29 = scalar_select %p28, 0, %s27
    %s30 = sadd.s32 1, %s21
    %s31 = scalar_select %p28, %s30, %s21
    %p32 = scmp.ge.s32.totalorder %s31, 2
    %s33 = scalar_select %p32, 0, %s31
    %s34 = ssub.s32 %s21, %s33
    %s35 = ssub.s32 %s22, %s29
    %s36 = sor.u32 %s34, %s35
    %p37 = scmp.eq.s32.totalorder %s36, 0
    %s39 = sadd.s32 %s38, 1
    %s40 = scalar_select %p37, %s38, %s39
    %p43 = pneg %p37
    %p44 = scmp.eq.s32.totalorder %s14, 3
    %p45 = por %p43, %p44
    %p46 = scmp.ne.s32.totalorder %s38, %s41
    %p47 = scmp.eq.s32.totalorder %s14, 0
    %p48 = por %p46, %p47
    %p49 = scmp.ne.s32.totalorder %s38, %s41
    %p50 = scmp.eq.s32.totalorder %s19, 3
    %p51 = por %p49, %p50
    %p52 = scmp.ne.s32.totalorder %s41, %s42
    %p53 = scmp.eq.s32.totalorder %s19, 0
    %p54 = por %p52, %p53
    %p55 = scmp.ne.s32.totalorder %s41, %s42
    %p56 = scmp.eq.s32.totalorder %s20, 3
    %p57 = por %p55, %p56
    %p59 = scmp.ne.s32.totalorder %s42, %s58
    %p60 = scmp.eq.s32.totalorder %s20, 0
    %p61 = por %p59, %p60
    %s62 = ssub.s32 %s21, %s33
    %s63 = ssub.s32 %s22, %s29
    %s64 = sor.u32 %s62, %s63
    %p65 = scmp.eq.s32.totalorder %s64, 0
    %s67 = sadd.s32 %s66, 1
    %s68 = scalar_select %p65, %s66, %s67
    %p71 = pneg %p65
    %p72 = scmp.eq.s32.totalorder %s14, 3
    %p73 = por %p71, %p72
    %p74 = scmp.ne.s32.totalorder %s66, %s69
    %p75 = scmp.eq.s32.totalorder %s14, 0
    %p76 = por %p74, %p75
    %p77 = scmp.ne.s32.totalorder %s66, %s69
    %p78 = scmp.eq.s32.totalorder %s19, 3
    %p79 = por %p77, %p78
    %p80 = scmp.ne.s32.totalorder %s69, %s70
    %p81 = scmp.eq.s32.totalorder %s19, 0
    %p82 = por %p80, %p81
    %p83 = scmp.ne.s32.totalorder %s69, %s70
    %p84 = scmp.eq.s32.totalorder %s20, 3
    %p85 = por %p83, %p84
    %p87 = scmp.ne.s32.totalorder %s70, %s86
    %p88 = scmp.eq.s32.totalorder %s20, 0
    %p89 = por %p87, %p88
    %s91 = sadd.s32 %s90, 1
    %p94 = scmp.eq.s32.totalorder %s14, 3
    %p95 = scmp.ne.s32.totalorder %s90, %s92
    %p96 = scmp.eq.s32.totalorder %s14, 0
    %p97 = por %p95, %p96
    %p98 = scmp.ne.s32.totalorder %s90, %s92
    %p99 = scmp.eq.s32.totalorder %s19, 3
    %p100 = por %p98, %p99
    %p101 = scmp.ne.s32.totalorder %s92, %s93
    %p102 = scmp.eq.s32.totalorder %s19, 0
    %p103 = por %p101, %p102
    %p104 = scmp.ne.s32.totalorder %s92, %s93
    %p105 = scmp.eq.s32.totalorder %s20, 3
    %p106 = por %p104, %p105
    %p108 = scmp.ne.s32.totalorder %s93, %s107
    %p109 = scmp.eq.s32.totalorder %s20, 0
    %p110 = por %p108, %p109
    %s112 = sadd.s32 %s111, 1
    %p115 = scmp.eq.s32.totalorder %s14, 3
    %p116 = scmp.ne.s32.totalorder %s111, %s113
    %p117 = scmp.eq.s32.totalorder %s14, 0
    %p118 = por %p116, %p117
    %p119 = scmp.ne.s32.totalorder %s111, %s113
    %p120 = scmp.eq.s32.totalorder %s19, 3
    %p121 = por %p119, %p120
    %p122 = scmp.ne.s32.totalorder %s113, %s114
    %p123 = scmp.eq.s32.totalorder %s19, 0
    %p124 = por %p122, %p123
    %p125 = scmp.ne.s32.totalorder %s113, %s114
    %p126 = scmp.eq.s32.totalorder %s20, 3
    %p127 = por %p125, %p126
    %p129 = scmp.ne.s32.totalorder %s114, %s128
    %p130 = scmp.eq.s32.totalorder %s20, 0
    %p131 = por %p129, %p130
    %s133 = sadd.s32 %s132, 1
    %p136 = scmp.eq.s32.totalorder %s14, 3
    %p137 = scmp.ne.s32.totalorder %s132, %s134
    %p138 = scmp.eq.s32.totalorder %s14, 0
    %p139 = por %p137, %p138
    %p140 = scmp.ne.s32.totalorder %s132, %s134
    %p141 = scmp.eq.s32.totalorder %s19, 3
    %p142 = por %p140, %p141
    %p143 = scmp.ne.s32.totalorder %s134, %s135
    %p144 = scmp.eq.s32.totalorder %s19, 0
    %p145 = por %p143, %p144
    %p146 = scmp.ne.s32.totalorder %s134, %s135
    %p147 = scmp.eq.s32.totalorder %s20, 3
    %p148 = por %p146, %p147
    %p150 = scmp.ne.s32.totalorder %s135, %s149
    %p151 = scmp.eq.s32.totalorder %s20, 0
    %p152 = por %p150, %p151
    %s154 = sadd.s32 %s153, 1
    %p157 = scmp.eq.s32.totalorder %s14, 3
    %p158 = scmp.ne.s32.totalorder %s153, %s155
    %p159 = scmp.eq.s32.totalorder %s14, 0
    %p160 = por %p158, %p159
    %p161 = scmp.ne.s32.totalorder %s153, %s155
    %p162 = scmp.eq.s32.totalorder %s19, 3
    %p163 = por %p161, %p162
    %p164 = scmp.ne.s32.totalorder %s155, %s156
    %p165 = scmp.eq.s32.totalorder %s19, 0
    %p166 = por %p164, %p165
    %p167 = scmp.ne.s32.totalorder %s155, %s156
    %p168 = scmp.eq.s32.totalorder %s20, 3
    %p169 = por %p167, %p168
    %p171 = scmp.ne.s32.totalorder %s156, %s170
    %p172 = scmp.eq.s32.totalorder %s20, 0
    %p173 = por %p171, %p172
    %s175 = sadd.s32 %s174, 1
    %p178 = scmp.eq.s32.totalorder %s14, 3
    %p179 = scmp.ne.s32.totalorder %s174, %s176
    %p180 = scmp.eq.s32.totalorder %s14, 0
    %p181 = por %p179, %p180
    %p182 = scmp.ne.s32.totalorder %s174, %s176
    %p183 = scmp.eq.s32.totalorder %s19, 3
    %p184 = por %p182, %p183
    %p185 = scmp.ne.s32.totalorder %s176, %s177
    %p186 = scmp.eq.s32.totalorder %s19, 0
    %p187 = por %p185, %p186
    %p188 = scmp.ne.s32.totalorder %s176, %s177
    %p189 = scmp.eq.s32.totalorder %s20, 3
    %p190 = por %p188, %p189
    %p192 = scmp.ne.s32.totalorder %s177, %s191
    %p193 = scmp.eq.s32.totalorder %s20, 0
    %p194 = por %p192, %p193
    %s196 = sadd.s32 %s195, 1
    %p199 = scmp.eq.s32.totalorder %s14, 3
    %p200 = scmp.ne.s32.totalorder %s195, %s197
    %p201 = scmp.eq.s32.totalorder %s14, 0
    %p202 = por %p200, %p201
    %p203 = scmp.ne.s32.totalorder %s195, %s197
    %p204 = scmp.eq.s32.totalorder %s19, 3
    %p205 = por %p203, %p204
    %p206 = scmp.ne.s32.totalorder %s197, %s198
    %p207 = scmp.eq.s32.totalorder %s19, 0
    %p208 = por %p206, %p207
    %p209 = scmp.ne.s32.totalorder %s197, %s198
    %p210 = scmp.eq.s32.totalorder %s20, 3
    %p211 = por %p209, %p210
    %p213 = scmp.ne.s32.totalorder %s198, %s212
    %p214 = scmp.eq.s32.totalorder %s20, 0
    %p215 = por %p213, %p214
    %s216 = ssub.s32 %s21, %s33
    %s217 = ssub.s32 %s22, %s29
    %s218 = sor.u32 %s216, %s217
    %p219 = scmp.eq.s32.totalorder %s218, 0
    %s221 = sadd.s32 %s220, 1
    %s222 = scalar_select %p219, %s220, %s221
    %p225 = pneg %p219
    %p226 = scmp.eq.s32.totalorder %s14, 3
    %p227 = por %p225, %p226
    %p228 = scmp.ne.s32.totalorder %s220, %s223
    %p229 = scmp.eq.s32.totalorder %s14, 0
    %p230 = por %p228, %p229
    %p231 = scmp.ne.s32.totalorder %s220, %s223
    %p232 = scmp.eq.s32.totalorder %s19, 3
    %p233 = por %p231, %p232
    %p234 = scmp.ne.s32.totalorder %s223, %s224
    %p235 = scmp.eq.s32.totalorder %s19, 0
    %p236 = por %p234, %p235
    %p237 = scmp.ne.s32.totalorder %s223, %s224
    %p238 = scmp.eq.s32.totalorder %s20, 3
    %p239 = por %p237, %p238
    %p241 = scmp.ne.s32.totalorder %s224, %s240
    %p242 = scmp.eq.s32.totalorder %s20, 0
    %p243 = por %p241, %p242
    %p244 = scmp.le.s32.totalorder 1, %s14
    %p245 = scmp.lt.s32.totalorder %s14, 5
    %p246 = pnand %p244, %p245
    %p247 = pneg %p246
    // Predicated region
    $region9: #{srcnn_forward.1} parent=5 // pred_check
      _
    $region10: #{srcnn_forward.1} parent=5 // pred_check_branch
      %249 = sbr.rel (%p246) target = $region12
    $region11: #{srcnn_forward.1} parent=5 // pred_region
      %s250 = ssub.s32 %s14, 1
      // Predicated region
      $region13: #{srcnn_forward.1} parent=11 // pred_check
        %p251 = pneg %p103
      $region14: #{srcnn_forward.1} parent=11 // pred_check_branch
        %253 = sbr.rel (%p251) target = $region16
      $region15: #{srcnn_forward.1} parent=11 // pred_region
        _
      $region16: #{srcnn_forward.1} parent=11 // pred_fallthru
        _
      // Predicated region
      $region17: #{srcnn_forward.1} parent=11 // pred_check
        %p254 = pneg %p124
      $region18: #{srcnn_forward.1} parent=11 // pred_check_branch
        %256 = sbr.rel (%p254) target = $region20
      $region19: #{srcnn_forward.1} parent=11 // pred_region
        _
      $region20: #{srcnn_forward.1} parent=11 // pred_fallthru
        _
      // Predicated region
      $region21: #{srcnn_forward.1} parent=11 // pred_check
        %p257 = pneg %p145
      $region22: #{srcnn_forward.1} parent=11 // pred_check_branch
        %259 = sbr.rel (%p257) target = $region24
      $region23: #{srcnn_forward.1} parent=11 // pred_region
        _
      $region24: #{srcnn_forward.1} parent=11 // pred_fallthru
        _
      // Predicated region
      $region25: #{srcnn_forward.1} parent=11 // pred_check
        %p260 = pneg %p166
      $region26: #{srcnn_forward.1} parent=11 // pred_check_branch
        %262 = sbr.rel (%p260) target = $region28
      $region27: #{srcnn_forward.1} parent=11 // pred_region
        _
      $region28: #{srcnn_forward.1} parent=11 // pred_fallthru
        _
      // Predicated region
      $region29: #{srcnn_forward.1} parent=11 // pred_check
        %p263 = pneg %p187
      $region30: #{srcnn_forward.1} parent=11 // pred_check_branch
        %265 = sbr.rel (%p263) target = $region32
      $region31: #{srcnn_forward.1} parent=11 // pred_region
        _
      $region32: #{srcnn_forward.1} parent=11 // pred_fallthru
        _
      // Predicated region
      $region33: #{srcnn_forward.1} parent=11 // pred_check
        %p266 = pneg %p208
      $region34: #{srcnn_forward.1} parent=11 // pred_check_branch
        %268 = sbr.rel (%p266) target = $region36
      $region35: #{srcnn_forward.1} parent=11 // pred_region
        _
      $region36: #{srcnn_forward.1} parent=11 // pred_fallthru
        _
    $region12: #{srcnn_forward.1} parent=5 // pred_fallthru
      _
    %p269 = scmp.lt.s32.totalorder %s14, 4
    // Predicated region
    $region37: #{srcnn_forward.1} parent=5 // pred_check
      %p270 = pneg %p269
    $region38: #{srcnn_forward.1} parent=5 // pred_check_branch
      %272 = sbr.rel (%p270) target = $region40
    $region39: #{srcnn_forward.1} parent=5 // pred_region
      // Predicated region
      $region41: #{srcnn_forward.1} parent=39 // pred_check
        %p273 = pneg %p48
      $region42: #{srcnn_forward.1} parent=39 // pred_check_branch
        %275 = sbr.rel (%p273) target = $region44
      $region43: #{srcnn_forward.1} parent=39 // pred_region
        %s276 = smul.u32 8, %s22
        %p277 = scmp.lt.s32.totalorder %s21, 1
        %s278 = scalar_select %p277, %s21, 1
        %p279 = scmp.lt.s32.totalorder %s276, 15
        %s280 = scalar_select %p279, %s276, 15
        %s281 = smul.addr %s280, 4
        %s282 = smul.addr %s278, 64
        %s283 = sadd.s32 %s281, %s282
        %s284 = smul.addr %s283, 8
        %s285 = scalar_lea.vmem %s0, %s284
        %s286 = smul.u32 8, %s22
      $region44: #{srcnn_forward.1} parent=39 // pred_fallthru
        _
      // Predicated region
      $region45: #{srcnn_forward.1} parent=39 // pred_check
        %p287 = pneg %p76
      $region46: #{srcnn_forward.1} parent=39 // pred_check_branch
        %289 = sbr.rel (%p287) target = $region48
      $region47: #{srcnn_forward.1} parent=39 // pred_region
        %p290 = scmp.lt.s32.totalorder %s21, 1
        %s291 = scalar_select %p290, %s21, 1
        %p292 = scmp.lt.s32.totalorder %s22, 1
        %s293 = scalar_select %p292, %s22, 1
        %s294 = smul.addr %s293, 48
        %s295 = smul.addr %s291, 96
        %s296 = sadd.s32 %s294, %s295
        %s297 = smul.addr %s296, 8
        %s298 = scalar_lea.vmem %s1, %s297
      $region48: #{srcnn_forward.1} parent=39 // pred_fallthru
        _
    $region40: #{srcnn_forward.1} parent=5 // pred_fallthru
      _
    %p299 = scmp.le.s32.totalorder 1, %s14
    %p300 = scmp.lt.s32.totalorder %s14, 5
    %p301 = pnand %p299, %p300
    %p302 = pneg %p301
    // Predicated region
    $region49: #{srcnn_forward.1} parent=5 // pred_check
      _
    $region50: #{srcnn_forward.1} parent=5 // pred_check_branch
      %304 = sbr.rel (%p301) target = $region52
    $region51: #{srcnn_forward.1} parent=5 // pred_region
      %s305 = ssub.s32 %s14, 1
      %s306 = smul.u32 8, %s24
      %p307 = scmp.lt.s32.totalorder %s23, 1
      %s308 = scalar_select %p307, %s23, 1
      %p309 = scmp.lt.s32.totalorder %s306, 15
      %s310 = scalar_select %p309, %s306, 15
      %s311 = smul.addr %s310, 4
      %s312 = smul.addr %s308, 64
      %s313 = sadd.s32 %s311, %s312
      %s314 = smul.addr %s313, 8
      %s315 = scalar_lea.vmem %s0, %s314
      %p316 = pneg %p54
      %p317 = pneg %p51
      %p318 = scmp.lt.s32.totalorder %s23, 1
      %s319 = scalar_select %p318, %s23, 1
      %p320 = scmp.lt.s32.totalorder %s24, 1
      %s321 = scalar_select %p320, %s24, 1
      %s322 = smul.addr %s321, 48
      %s323 = smul.addr %s319, 96
      %s324 = sadd.s32 %s322, %s323
      %s325 = smul.addr %s324, 8
      %s326 = scalar_lea.vmem %s1, %s325
      %p327 = pneg %p82
      %p328 = pneg %p79
      %p329 = pneg %p103
      %p330 = pneg %p100
      %p331 = pneg %p124
      %p332 = pneg %p121
      %p333 = pneg %p145
      %p334 = pneg %p142
      %p335 = pneg %p166
      %p336 = pneg %p163
      %p337 = pneg %p187
      %p338 = pneg %p184
      %p339 = pneg %p208
      %p340 = pneg %p205
      %p341 = pneg %p236
      %p342 = pneg %p233
      %s343 = smul.u32 8, %s24
      %p344 = scmp.lt.s32.totalorder %s23, 1
      %s345 = scalar_select %p344, %s23, 1
      %p346 = scmp.lt.s32.totalorder %s343, 15
      %s347 = scalar_select %p346, %s343, 15
      %s348 = smul.addr %s345, 16
      %s349 = sadd.s32 %s347, %s348
      %s350 = smul.addr %s349, 4
      %s351 = scalar_lea.vmem %s8, %s350
      %s352 = smul.u32 8, %s24
      %p353 = scmp.lt.s32.totalorder %s23, 1
      %s354 = scalar_select %p353, %s23, 1
      %p355 = scmp.lt.s32.totalorder %s352, 15
      %s356 = scalar_select %p355, %s352, 15
      %s357 = smul.addr %s356, 4
      %s358 = smul.addr %s354, 64
      %s359 = sadd.s32 %s357, %s358
      %s360 = smul.addr %s359, 8
      %s361 = scalar_lea.vmem %s0, %s360
      %s362 = smul.u32 8, %s24
      %p363 = scmp.lt.s32.totalorder %s23, 1
      %s364 = scalar_select %p363, %s23, 1
      %p365 = scmp.lt.s32.totalorder %s24, 1
      %s366 = scalar_select %p365, %s24, 1
      %s367 = smul.addr %s366, 48
      %s368 = smul.addr %s364, 96
      %s369 = sadd.s32 %s367, %s368
      %s370 = smul.addr %s369, 8
      %s371 = scalar_lea.vmem %s1, %s370
      %s372 = smul.u32 8, %s24
      %p373 = scmp.lt.s32.totalorder %s23, 1
      %s374 = scalar_select %p373, %s23, 1
      %p375 = scmp.lt.s32.totalorder %s372, 15
      %s376 = scalar_select %p375, %s372, 15
      %s377 = smul.addr %s374, 16
      %s378 = sadd.s32 %s376, %s377
      %s379 = smul.addr %s378, 4
      %s380 = scalar_lea.vmem %s8, %s379
      %s381 = smul.u32 8, %s24
      %s382 = smul.u32 %s24, 8
      %v383 = vld [vmem:[%s361] sm:$0xff]
      %v384 = vld [vmem:[%s361 + $0x8] sm:$0xff]
      %v385 = vld [vmem:[%s361 + $0x10] sm:$0xff]
      %v386 = vld [vmem:[%s361 + $0x18] sm:$0xff]
      %v387 = vld [vmem:[%s361 + $0x20] sm:$0xff]
      %v388 = vld [vmem:[%s361 + $0x28] sm:$0xff]
      %v389 = vld [vmem:[%s361 + $0x30] sm:$0xff]
      %v390 = vld [vmem:[%s361 + $0x38] sm:$0xff]
      %v391 = vld [vmem:[%s361 + $0x40] sm:$0xff]
      %v392 = vld [vmem:[%s361 + $0x48] sm:$0xff]
      %v393 = vld [vmem:[%s361 + $0x50] sm:$0xff]
      %v394 = vld [vmem:[%s361 + $0x58] sm:$0xff]
      %v395 = vld [vmem:[%s361 + $0x60] sm:$0xff]
      %v396 = vld [vmem:[%s361 + $0x68] sm:$0xff]
      %v397 = vld [vmem:[%s361 + $0x70] sm:$0xff]
      %v398 = vld [vmem:[%s361 + $0x78] sm:$0xff]
      %v399 = vld [vmem:[%s361 + $0x80] sm:$0xff]
      %v400 = vld [vmem:[%s361 + $0x88] sm:$0xff]
      %v401 = vld [vmem:[%s361 + $0x90] sm:$0xff]
      %v402 = vld [vmem:[%s361 + $0x98] sm:$0xff]
      %v403 = vld [vmem:[%s361 + $0xa0] sm:$0xff]
      %v404 = vld [vmem:[%s361 + $0xa8] sm:$0xff]
      %v405 = vld [vmem:[%s361 + $0xb0] sm:$0xff]
      %v406 = vld [vmem:[%s361 + $0xb8] sm:$0xff]
      %v407 = vld [vmem:[%s361 + $0xc0] sm:$0xff]
      %v408 = vld [vmem:[%s361 + $0xc8] sm:$0xff]
      %v409 = vld [vmem:[%s361 + $0xd0] sm:$0xff]
      %v410 = vld [vmem:[%s361 + $0xd8] sm:$0xff]
      %v411 = vld [vmem:[%s361 + $0xe0] sm:$0xff]
      %v412 = vld [vmem:[%s361 + $0xe8] sm:$0xff]
      %v413 = vld [vmem:[%s361 + $0xf0] sm:$0xff]
      %v414 = vld [vmem:[%s361 + $0xf8] sm:$0xff]
      %vm415 = vcmask 130048
      %416 = vst.msk [vmem:[#allocation2] sm:$0xff] %vm415, %v383
      %417 = vst.msk [vmem:[#allocation2 + $0x8] sm:$0xff] %vm415, %v384
      %418 = vst.msk [vmem:[#allocation2 + $0x10] sm:$0xff] %vm415, %v385
      %419 = vst.msk [vmem:[#allocation2 + $0x18] sm:$0xff] %vm415, %v386
      %420 = vst.msk [vmem:[#allocation2 + $0x20] sm:$0xff] %vm415, %v387
      %421 = vst.msk [vmem:[#allocation2 + $0x28] sm:$0xff] %vm415, %v388
      %422 = vst.msk [vmem:[#allocation2 + $0x30] sm:$0xff] %vm415, %v389
      %423 = vst.msk [vmem:[#allocation2 + $0x38] sm:$0xff] %vm415, %v390
      %424 = vst.msk [vmem:[#allocation2 + $0x40] sm:$0xff] %vm415, %v391
      %425 = vst.msk [vmem:[#allocation2 + $0x48] sm:$0xff] %vm415, %v392
      %426 = vst.msk [vmem:[#allocation2 + $0x50] sm:$0xff] %vm415, %v393
      %427 = vst.msk [vmem:[#allocation2 + $0x58] sm:$0xff] %vm415, %v394
      %428 = vst.msk [vmem:[#allocation2 + $0x60] sm:$0xff] %vm415, %v395
      %429 = vst.msk [vmem:[#allocation2 + $0x68] sm:$0xff] %vm415, %v396
      %430 = vst.msk [vmem:[#allocation2 + $0x70] sm:$0xff] %vm415, %v397
      %431 = vst.msk [vmem:[#allocation2 + $0x78] sm:$0xff] %vm415, %v398
      %432 = vst.msk [vmem:[#allocation2 + $0x80] sm:$0xff] %vm415, %v399
      %433 = vst.msk [vmem:[#allocation2 + $0x88] sm:$0xff] %vm415, %v400
      %434 = vst.msk [vmem:[#allocation2 + $0x90] sm:$0xff] %vm415, %v401
      %435 = vst.msk [vmem:[#allocation2 + $0x98] sm:$0xff] %vm415, %v402
      %436 = vst.msk [vmem:[#allocation2 + $0xa0] sm:$0xff] %vm415, %v403
      %437 = vst.msk [vmem:[#allocation2 + $0xa8] sm:$0xff] %vm415, %v404
      %438 = vst.msk [vmem:[#allocation2 + $0xb0] sm:$0xff] %vm415, %v405
      %439 = vst.msk [vmem:[#allocation2 + $0xb8] sm:$0xff] %vm415, %v406
      %440 = vst.msk [vmem:[#allocation2 + $0xc0] sm:$0xff] %vm415, %v407
      %441 = vst.msk [vmem:[#allocation2 + $0xc8] sm:$0xff] %vm415, %v408
      %442 = vst.msk [vmem:[#allocation2 + $0xd0] sm:$0xff] %vm415, %v409
      %443 = vst.msk [vmem:[#allocation2 + $0xd8] sm:$0xff] %vm415, %v410
      %444 = vst.msk [vmem:[#allocation2 + $0xe0] sm:$0xff] %vm415, %v411
      %445 = vst.msk [vmem:[#allocation2 + $0xe8] sm:$0xff] %vm415, %v412
      %446 = vst.msk [vmem:[#allocation2 + $0xf0] sm:$0xff] %vm415, %v413
      %447 = vst.msk [vmem:[#allocation2 + $0xf8] sm:$0xff] %vm415, %v414
      %v448 = vld [vmem:[%s371] sm:$0xff]
      %v449 = vld [vmem:[%s371 + $0x8] sm:$0xff]
      %v450 = vld [vmem:[%s371 + $0x10] sm:$0xff]
      %v451 = vld [vmem:[%s371 + $0x18] sm:$0xff]
      %v452 = vld [vmem:[%s371 + $0x20] sm:$0xff]
      %v453 = vld [vmem:[%s371 + $0x28] sm:$0xff]
      %v454 = vld [vmem:[%s371 + $0x30] sm:$0xff]
      %v455 = vld [vmem:[%s371 + $0x38] sm:$0xff]
      %v456 = vld [vmem:[%s371 + $0x40] sm:$0xff]
      %v457 = vld [vmem:[%s371 + $0x48] sm:$0xff]
      %v458 = vld [vmem:[%s371 + $0x50] sm:$0xff]
      %v459 = vld [vmem:[%s371 + $0x58] sm:$0xff]
      %v460 = vld [vmem:[%s371 + $0x60] sm:$0xff]
      %v461 = vld [vmem:[%s371 + $0x68] sm:$0xff]
      %v462 = vld [vmem:[%s371 + $0x70] sm:$0xff]
      %v463 = vld [vmem:[%s371 + $0x78] sm:$0xff]
      %v464 = vld [vmem:[%s371 + $0x80] sm:$0xff]
      %v465 = vld [vmem:[%s371 + $0x88] sm:$0xff]
      %v466 = vld [vmem:[%s371 + $0x90] sm:$0xff]
      %v467 = vld [vmem:[%s371 + $0x98] sm:$0xff]
      %v468 = vld [vmem:[%s371 + $0xa0] sm:$0xff]
      %v469 = vld [vmem:[%s371 + $0xa8] sm:$0xff]
      %v470 = vld [vmem:[%s371 + $0xb0] sm:$0xff]
      %v471 = vld [vmem:[%s371 + $0xb8] sm:$0xff]
      %v472 = vld [vmem:[%s371 + $0xc0] sm:$0xff]
      %v473 = vld [vmem:[%s371 + $0xc8] sm:$0xff]
      %v474 = vld [vmem:[%s371 + $0xd0] sm:$0xff]
      %v475 = vld [vmem:[%s371 + $0xd8] sm:$0xff]
      %v476 = vld [vmem:[%s371 + $0xe0] sm:$0xff]
      %v477 = vld [vmem:[%s371 + $0xe8] sm:$0xff]
      %v478 = vld [vmem:[%s371 + $0xf0] sm:$0xff]
      %v479 = vld [vmem:[%s371 + $0xf8] sm:$0xff]
      %v480 = vld [vmem:[%s371 + $0x100] sm:$0xff]
      %v481 = vld [vmem:[%s371 + $0x108] sm:$0xff]
      %v482 = vld [vmem:[%s371 + $0x110] sm:$0xff]
      %v483 = vld [vmem:[%s371 + $0x118] sm:$0xff]
      %v484 = vld [vmem:[%s371 + $0x120] sm:$0xff]
      %v485 = vld [vmem:[%s371 + $0x128] sm:$0xff]
      %v486 = vld [vmem:[%s371 + $0x130] sm:$0xff]
      %v487 = vld [vmem:[%s371 + $0x138] sm:$0xff]
      %v488 = vld [vmem:[%s371 + $0x140] sm:$0xff]
      %v489 = vld [vmem:[%s371 + $0x148] sm:$0xff]
      %v490 = vld [vmem:[%s371 + $0x150] sm:$0xff]
      %v491 = vld [vmem:[%s371 + $0x158] sm:$0xff]
      %v492 = vld [vmem:[%s371 + $0x160] sm:$0xff]
      %v493 = vld [vmem:[%s371 + $0x168] sm:$0xff]
      %v494 = vld [vmem:[%s371 + $0x170] sm:$0xff]
      %v495 = vld [vmem:[%s371 + $0x178] sm:$0xff]
      %s496 = scalar_lea.vmem [#allocation2], 256
      %497 = vst.msk [vmem:[%s496] sm:$0xff] %vm415, %v448
      %498 = vst.msk [vmem:[%s496 + $0x8] sm:$0xff] %vm415, %v449
      %499 = vst.msk [vmem:[%s496 + $0x10] sm:$0xff] %vm415, %v450
      %500 = vst.msk [vmem:[%s496 + $0x18] sm:$0xff] %vm415, %v451
      %501 = vst.msk [vmem:[%s496 + $0x20] sm:$0xff] %vm415, %v452
      %502 = vst.msk [vmem:[%s496 + $0x28] sm:$0xff] %vm415, %v453
      %503 = vst.msk [vmem:[%s496 + $0x30] sm:$0xff] %vm415, %v454
      %504 = vst.msk [vmem:[%s496 + $0x38] sm:$0xff] %vm415, %v455
      %505 = vst.msk [vmem:[%s496 + $0x40] sm:$0xff] %vm415, %v456
      %506 = vst.msk [vmem:[%s496 + $0x48] sm:$0xff] %vm415, %v457
      %507 = vst.msk [vmem:[%s496 + $0x50] sm:$0xff] %vm415, %v458
      %508 = vst.msk [vmem:[%s496 + $0x58] sm:$0xff] %vm415, %v459
      %509 = vst.msk [vmem:[%s496 + $0x60] sm:$0xff] %vm415, %v460
      %510 = vst.msk [vmem:[%s496 + $0x68] sm:$0xff] %vm415, %v461
      %511 = vst.msk [vmem:[%s496 + $0x70] sm:$0xff] %vm415, %v462
      %512 = vst.msk [vmem:[%s496 + $0x78] sm:$0xff] %vm415, %v463
      %513 = vst.msk [vmem:[%s496 + $0x80] sm:$0xff] %vm415, %v464
      %514 = vst.msk [vmem:[%s496 + $0x88] sm:$0xff] %vm415, %v465
      %515 = vst.msk [vmem:[%s496 + $0x90] sm:$0xff] %vm415, %v466
      %516 = vst.msk [vmem:[%s496 + $0x98] sm:$0xff] %vm415, %v467
      %517 = vst.msk [vmem:[%s496 + $0xa0] sm:$0xff] %vm415, %v468
      %518 = vst.msk [vmem:[%s496 + $0xa8] sm:$0xff] %vm415, %v469
      %519 = vst.msk [vmem:[%s496 + $0xb0] sm:$0xff] %vm415, %v470
      %520 = vst.msk [vmem:[%s496 + $0xb8] sm:$0xff] %vm415, %v471
      %521 = vst.msk [vmem:[%s496 + $0xc0] sm:$0xff] %vm415, %v472
      %522 = vst.msk [vmem:[%s496 + $0xc8] sm:$0xff] %vm415, %v473
      %523 = vst.msk [vmem:[%s496 + $0xd0] sm:$0xff] %vm415, %v474
      %524 = vst.msk [vmem:[%s496 + $0xd8] sm:$0xff] %vm415, %v475
      %525 = vst.msk [vmem:[%s496 + $0xe0] sm:$0xff] %vm415, %v476
      %526 = vst.msk [vmem:[%s496 + $0xe8] sm:$0xff] %vm415, %v477
      %527 = vst.msk [vmem:[%s496 + $0xf0] sm:$0xff] %vm415, %v478
      %528 = vst.msk [vmem:[%s496 + $0xf8] sm:$0xff] %vm415, %v479
      %529 = vst.msk [vmem:[%s496 + $0x100] sm:$0xff] %vm415, %v480
      %530 = vst.msk [vmem:[%s496 + $0x108] sm:$0xff] %vm415, %v481
      %531 = vst.msk [vmem:[%s496 + $0x110] sm:$0xff] %vm415, %v482
      %532 = vst.msk [vmem:[%s496 + $0x118] sm:$0xff] %vm415, %v483
      %533 = vst.msk [vmem:[%s496 + $0x120] sm:$0xff] %vm415, %v484
      %534 = vst.msk [vmem:[%s496 + $0x128] sm:$0xff] %vm415, %v485
      %535 = vst.msk [vmem:[%s496 + $0x130] sm:$0xff] %vm415, %v486
      %536 = vst.msk [vmem:[%s496 + $0x138] sm:$0xff] %vm415, %v487
      %537 = vst.msk [vmem:[%s496 + $0x140] sm:$0xff] %vm415, %v488
      %538 = vst.msk [vmem:[%s496 + $0x148] sm:$0xff] %vm415, %v489
      %539 = vst.msk [vmem:[%s496 + $0x150] sm:$0xff] %vm415, %v490
      %540 = vst.msk [vmem:[%s496 + $0x158] sm:$0xff] %vm415, %v491
      %541 = vst.msk [vmem:[%s496 + $0x160] sm:$0xff] %vm415, %v492
      %542 = vst.msk [vmem:[%s496 + $0x168] sm:$0xff] %vm415, %v493
      %543 = vst.msk [vmem:[%s496 + $0x170] sm:$0xff] %vm415, %v494
      %544 = vst.msk [vmem:[%s496 + $0x178] sm:$0xff] %vm415, %v495
      loop: start=0, step=1, limit=12
      $region53: #{srcnn_forward.1} parent=51 // loop_pre_header
        _
      $region54: #{srcnn_forward.1} parent=51 // loop_header
        %s546 = sphi 0, %s550
        %p547 = scmp.ge.s32.totalorder %s546, 12
      $region55: #{srcnn_forward.1} parent=51 // loop_header_branch
        %549 = sbr.rel (%p547) target = $region59
      $region56: #{srcnn_forward.1} parent=51 // loop_body
        %s551 = smul.u32 %s546, 32
        %s552 = scalar_lea.vmem [#allocation2], %s551
        %v553 = vld [vmem:[%s552] sm:$0xff]
        %v554 = vld [vmem:[%s552 + $0x8] sm:$0xff]
        %v555 = vld [vmem:[%s552 + $0x10] sm:$0xff]
        %v556 = vld [vmem:[%s552 + $0x18] sm:$0xff]
        %v557 = vld [vmem:[%s552 + $0x20] sm:$0xff]
        %v558 = vld [vmem:[%s552 + $0x28] sm:$0xff]
        %v559 = vld [vmem:[%s552 + $0x30] sm:$0xff]
        %v560 = vld [vmem:[%s552 + $0x38] sm:$0xff]
        %v561 = vld [vmem:[%s552 + $0x40] sm:$0xff]
        %v562 = vld [vmem:[%s552 + $0x48] sm:$0xff]
        %v563 = vld [vmem:[%s552 + $0x50] sm:$0xff]
        %v564 = vld [vmem:[%s552 + $0x58] sm:$0xff]
        %v565 = vld [vmem:[%s552 + $0x60] sm:$0xff]
        %v566 = vld [vmem:[%s552 + $0x68] sm:$0xff]
        %v567 = vld [vmem:[%s552 + $0x70] sm:$0xff]
        %v568 = vld [vmem:[%s552 + $0x78] sm:$0xff]
        %v569 = vld [vmem:[%s552 + $0x80] sm:$0xff]
        %v570 = vld [vmem:[%s552 + $0x88] sm:$0xff]
        %v571 = vld [vmem:[%s552 + $0x90] sm:$0xff]
        %v572 = vld [vmem:[%s552 + $0x98] sm:$0xff]
        %v573 = vld [vmem:[%s552 + $0xa0] sm:$0xff]
        %v574 = vld [vmem:[%s552 + $0xa8] sm:$0xff]
        %v575 = vld [vmem:[%s552 + $0xb0] sm:$0xff]
        %v576 = vld [vmem:[%s552 + $0xb8] sm:$0xff]
        %v577 = vld [vmem:[%s552 + $0xc0] sm:$0xff]
        %v578 = vld [vmem:[%s552 + $0xc8] sm:$0xff]
        %v579 = vld [vmem:[%s552 + $0xd0] sm:$0xff]
        %v580 = vld [vmem:[%s552 + $0xd8] sm:$0xff]
        %v581 = vld [vmem:[%s552 + $0xe0] sm:$0xff]
        %v582 = vld [vmem:[%s552 + $0xe8] sm:$0xff]
        %v583 = vld [vmem:[%s552 + $0xf0] sm:$0xff]
        %v584 = vld [vmem:[%s552 + $0xf8] sm:$0xff]
        %v585 = vld [vmem:[%s552 + $0x100] sm:$0xff]
        %v586 = vld [vmem:[%s552 + $0x108] sm:$0xff]
        %v587 = vld [vmem:[%s552 + $0x110] sm:$0xff]
        %v588 = vld [vmem:[%s552 + $0x118] sm:$0xff]
        %v589 = vld [vmem:[%s2] sm:$0xff]
        %v590 = vld [vmem:[%s2 + $0x8] sm:$0xff]
        %v591 = vld [vmem:[%s2 + $0x10] sm:$0xff]
        %v592 = vld [vmem:[%s2 + $0x18] sm:$0xff]
        %v593 = vld [vmem:[%s2 + $0x20] sm:$0xff]
        %v594 = vld [vmem:[%s2 + $0x28] sm:$0xff]
        %v595 = vld [vmem:[%s2 + $0x30] sm:$0xff]
        %v596 = vld [vmem:[%s2 + $0x38] sm:$0xff]
        %v597 = vld [vmem:[%s2 + $0x40] sm:$0xff]
        %v598 = vld [vmem:[%s2 + $0x48] sm:$0xff]
        %v599 = vld [vmem:[%s2 + $0x50] sm:$0xff]
        %v600 = vld [vmem:[%s2 + $0x58] sm:$0xff]
        %v601 = vld [vmem:[%s2 + $0x60] sm:$0xff]
        %v602 = vld [vmem:[%s2 + $0x68] sm:$0xff]
        %v603 = vld [vmem:[%s2 + $0x70] sm:$0xff]
        %v604 = vld [vmem:[%s2 + $0x78] sm:$0xff]
        %v605 = vld [vmem:[%s2 + $0x80] sm:$0xff]
        %v606 = vld [vmem:[%s2 + $0x88] sm:$0xff]
        %v607 = vld [vmem:[%s2 + $0x90] sm:$0xff]
        %v608 = vld [vmem:[%s2 + $0x98] sm:$0xff]
        %v609 = vld [vmem:[%s2 + $0xa0] sm:$0xff]
        %v610 = vld [vmem:[%s2 + $0xa8] sm:$0xff]
        %v611 = vld [vmem:[%s2 + $0xb0] sm:$0xff]
        %v612 = vld [vmem:[%s2 + $0xb8] sm:$0xff]
        %v613 = vld [vmem:[%s3] sm:$0xff]
        %v614 = vld [vmem:[%s3 + $0x8] sm:$0xff]
        %v615 = vld [vmem:[%s3 + $0x10] sm:$0xff]
        %v616 = vld [vmem:[%s3 + $0x18] sm:$0xff]
        %v617 = vld [vmem:[%s3 + $0x20] sm:$0xff]
        %v618 = vld [vmem:[%s3 + $0x28] sm:$0xff]
        %v619 = vld [vmem:[%s3 + $0x30] sm:$0xff]
        %v620 = vld [vmem:[%s3 + $0x38] sm:$0xff]
        %622 = vset.pattern.permute.xlu0 0
        %623 = vperm.xlu0 %622, %v613
        %v624 = vpop.permute.xlu0 %623
        %627 = vset.pattern.permute.xlu0 0
        %628 = vperm.xlu0 %627, %v614
        %v629 = vpop.permute.xlu0 %628
        %632 = vset.pattern.permute.xlu0 0
        %633 = vperm.xlu0 %632, %v615
        %v634 = vpop.permute.xlu0 %633
        %637 = vset.pattern.permute.xlu0 0
        %638 = vperm.xlu0 %637, %v616
        %v639 = vpop.permute.xlu0 %638
        %642 = vset.pattern.permute.xlu0 0
        %643 = vperm.xlu0 %642, %v617
        %v644 = vpop.permute.xlu0 %643
        %647 = vset.pattern.permute.xlu0 0
        %648 = vperm.xlu0 %647, %v618
        %v649 = vpop.permute.xlu0 %648
        %652 = vset.pattern.permute.xlu0 0
        %653 = vperm.xlu0 %652, %v619
        %v654 = vpop.permute.xlu0 %653
        %657 = vset.pattern.permute.xlu0 0
        %658 = vperm.xlu0 %657, %v620
        %v659 = vpop.permute.xlu0 %658
        %vm661 = vcmask 261120
        %v663 = vsel %vm661, %v591, 0
        %v666 = vsel %vm661, %v594, 0
        %v669 = vsel %vm661, %v597, 0
        %v672 = vsel %vm661, %v600, 0
        %v675 = vsel %vm661, %v603, 0
        %v678 = vsel %vm661, %v606, 0
        %v681 = vsel %vm661, %v609, 0
        %v684 = vsel %vm661, %v612, 0
        %686 = vmatprep.subr.mxu0 0.0
        %687 = vmatpush1.msra.mxu0 %v553
        %688 = vmatprep.subr.mxu0 0.0
        %689 = vmatpush1.msra.mxu0 %v554
        %690 = vmatprep.subr.mxu0 0.0
        %691 = vmatpush1.msra.mxu0 %v555
        %692 = vmatprep.subr.mxu0 0.0
        %693 = vmatpush1.msra.mxu0 %v556
        %694 = vmatprep.subr.mxu0 0.0
        %695 = vmatpush1.msra.mxu0 %v557
        %696 = vmatprep.subr.mxu0 0.0
        %697 = vmatpush1.msra.mxu0 %v558
        %698 = vmatprep.subr.mxu0 0.0
        %699 = vmatpush1.msra.mxu0 %v559
        %700 = vmatprep.subr.mxu0 0.0
        %701 = vmatpush1.msra.mxu0 %v560
        %702 = vmatprep.subr.mxu0 0.0
        %703 = vmatpush1.msra.mxu0 %v561
        %704 = vmatprep.subr.mxu0 0.0
        %705 = vmatpush1.msra.mxu0 %v562
        %706 = vmatprep.subr.mxu0 0.0
        %707 = vmatpush1.msra.mxu0 %v563
        %708 = vmatprep.subr.mxu0 0.0
        %709 = vmatpush1.msra.mxu0 %v564
        %710 = vmatprep.subr.mxu0 0.0
        %711 = vmatpush1.msra.mxu0 %v565
        %712 = vmatprep.subr.mxu0 0.0
        %713 = vmatpush1.msra.mxu0 %v566
        %714 = vmatprep.subr.mxu0 0.0
        %715 = vmatpush1.msra.mxu0 %v567
        %716 = vmatprep.subr.mxu0 0.0
        %717 = vmatpush1.msra.mxu0 %v568
        %718 = vmatprep.subr.mxu0 0.0
        %719 = vmatpush1.msra.mxu0 %v569
        %720 = vmatprep.subr.mxu0 0.0
        %721 = vmatpush1.msra.mxu0 %v570
        %722 = vmatprep.subr.mxu0 0.0
        %723 = vmatpush1.msra.mxu0 %v571
        %724 = vmatprep.subr.mxu0 0.0
        %725 = vmatpush1.msra.mxu0 %v572
        %726 = vmatprep.subr.mxu0 0.0
        %727 = vmatpush1.msra.mxu0 %v573
        %728 = vmatprep.subr.mxu0 0.0
        %729 = vmatpush1.msra.mxu0 %v574
        %730 = vmatprep.subr.mxu0 0.0
        %731 = vmatpush1.msra.mxu0 %v575
        %732 = vmatprep.subr.mxu0 0.0
        %733 = vmatpush1.msra.mxu0 %v576
        %734 = vmatprep.subr.mxu0 0.0
        %735 = vmatpush1.msra.mxu0 %v577
        %736 = vmatprep.subr.mxu0 0.0
        %737 = vmatpush1.msra.mxu0 %v578
        %738 = vmatprep.subr.mxu0 0.0
        %739 = vmatpush1.msra.mxu0 %v579
        %740 = vmatprep.subr.mxu0 0.0
        %741 = vmatpush1.msra.mxu0 %v580
        %742 = vmatprep.subr.mxu0 0.0
        %743 = vmatpush1.msra.mxu0 %v581
        %744 = vmatprep.subr.mxu0 0.0
        %745 = vmatpush1.msra.mxu0 %v582
        %746 = vmatprep.subr.mxu0 0.0
        %747 = vmatpush1.msra.mxu0 %v583
        %748 = vmatprep.subr.mxu0 0.0
        %749 = vmatpush1.msra.mxu0 %v584
        %750 = vmatprep.mubr.f32.mxu0 %v590
        %751 = vmatmul.mubr.f32.gmra.mrb[0].mxu0 %v589
        %v752 = vpop.f32.mrb[0].mxu0
        %v753 = vadd.f32 %v624, %v752
        %v754 = vpop.f32.mrb[0].mxu0
        %755 = vmatprep.mubr.f32.mxu0 %v593
        %756 = vmatmul.mubr.f32.gmra.mrb[0].mxu0 %v592
        %v757 = vpop.f32.mrb[0].mxu0
        %v758 = vadd.f32 %v629, %v757
        %v759 = vpop.f32.mrb[0].mxu0
        %760 = vmatprep.mubr.f32.mxu0 %v596
        %761 = vmatmul.mubr.f32.gmra.mrb[0].mxu0 %v595
        %v762 = vpop.f32.mrb[0].mxu0
        %v763 = vadd.f32 %v634, %v762
        %v764 = vpop.f32.mrb[0].mxu0
        %765 = vmatprep.mubr.f32.mxu0 %v599
        %766 = vmatmul.mubr.f32.gmra.mrb[0].mxu0 %v598
        %v767 = vpop.f32.mrb[0].mxu0
        %v768 = vadd.f32 %v639, %v767
        %v769 = vpop.f32.mrb[0].mxu0
        %770 = vmatprep.mubr.f32.mxu0 %v602
        %771 = vmatmul.mubr.f32.gmra.mrb[0].mxu0 %v601
        %v772 = vpop.f32.mrb[0].mxu0
        %v773 = vadd.f32 %v644, %v772
        %v774 = vpop.f32.mrb[0].mxu0
        %775 = vmatprep.mubr.f32.mxu0 %v605
        %776 = vmatmul.mubr.f32.gmra.mrb[0].mxu0 %v604
        %v777 = vpop.f32.mrb[0].mxu0
        %v778 = vadd.f32 %v649, %v777
        %v779 = vpop.f32.mrb[0].mxu0
        %780 = vmatprep.mubr.f32.mxu0 %v608
        %781 = vmatmul.mubr.f32.gmra.mrb[0].mxu0 %v607
        %v782 = vpop.f32.mrb[0].mxu0
        %v783 = vadd.f32 %v654, %v782
        %v784 = vpop.f32.mrb[0].mxu0
        %785 = vmatprep.mubr.f32.mxu0 %v611
        %786 = vmatmul.mubr.f32.gmra.mrb[0].mxu0 %v610
        %v787 = vpop.f32.mrb[0].mxu0
        %v788 = vadd.f32 %v659, %v787
        %v789 = vpop.f32.mrb[0].mxu0
        %790 = vdwg.mxu0
        %791 = vmatprep.subr.mxu0 0.0
        %792 = vmatpush1.msra.mxu0 %v585
        %793 = vmatprep.subr.mxu0 0.0
        %794 = vmatpush1.msra.mxu0 %v586
        %795 = vmatprep.subr.mxu0 0.0
        %796 = vmatpush1.msra.mxu0 %v587
        %797 = vmatprep.subr.mxu0 0.0
        %798 = vmatpush1.msra.mxu0 %v588
        %799 = vmatprep.subr.mxu0 0.0
        %800 = vmatpush1.msra.mxu0 0.0
        %801 = vmatprep.subr.mxu0 0.0
        %802 = vmatpush1.msra.mxu0 0.0
        %803 = vmatprep.subr.mxu0 0.0
        %804 = vmatpush1.msra.mxu0 0.0
        %805 = vmatprep.subr.mxu0 0.0
        %806 = vmatpush1.msra.mxu0 0.0
        %807 = vmatprep.subr.mxu0 0.0
        %808 = vmatpush1.msra.mxu0 0.0
        %809 = vmatprep.subr.mxu0 0.0
        %810 = vmatpush1.msra.mxu0 0.0
        %811 = vmatprep.subr.mxu0 0.0
        %812 = vmatpush1.msra.mxu0 0.0
        %813 = vmatprep.subr.mxu0 0.0
        %814 = vmatpush1.msra.mxu0 0.0
        %815 = vmatprep.subr.mxu0 0.0
        %816 = vmatpush1.msra.mxu0 0.0
        %817 = vmatprep.subr.mxu0 0.0
        %818 = vmatpush1.msra.mxu0 0.0
        %819 = vmatprep.subr.mxu0 0.0
        %820 = vmatpush1.msra.mxu0 0.0
        %821 = vmatprep.subr.mxu0 0.0
        %822 = vmatpush1.msra.mxu0 0.0
        %823 = vmatprep.subr.mxu0 0.0
        %824 = vmatpush1.msra.mxu0 0.0
        %825 = vmatprep.subr.mxu0 0.0
        %826 = vmatpush1.msra.mxu0 0.0
        %827 = vmatprep.subr.mxu0 0.0
        %828 = vmatpush1.msra.mxu0 0.0
        %829 = vmatprep.subr.mxu0 0.0
        %830 = vmatpush1.msra.mxu0 0.0
        %831 = vmatprep.subr.mxu0 0.0
        %832 = vmatpush1.msra.mxu0 0.0
        %833 = vmatprep.subr.mxu0 0.0
        %834 = vmatpush1.msra.mxu0 0.0
        %835 = vmatprep.subr.mxu0 0.0
        %836 = vmatpush1.msra.mxu0 0.0
        %837 = vmatprep.subr.mxu0 0.0
        %838 = vmatpush1.msra.mxu0 0.0
        %839 = vmatprep.subr.mxu0 0.0
        %840 = vmatpush1.msra.mxu0 0.0
        %841 = vmatprep.subr.mxu0 0.0
        %842 = vmatpush1.msra.mxu0 0.0
        %843 = vmatprep.subr.mxu0 0.0
        %844 = vmatpush1.msra.mxu0 0.0
        %845 = vmatprep.subr.mxu0 0.0
        %846 = vmatpush1.msra.mxu0 0.0
        %847 = vmatprep.subr.mxu0 0.0
        %848 = vmatpush1.msra.mxu0 0.0
        %849 = vmatprep.subr.mxu0 0.0
        %850 = vmatpush1.msra.mxu0 0.0
        %851 = vmatprep.subr.mxu0 0.0
        %852 = vmatpush1.msra.mxu0 0.0
        %853 = vmatprep.subr.mxu0 0.0
        %854 = vmatpush1.msra.mxu0 0.0
        %855 = vmatprep.mubr.f32.mxu0 0.0
        %856 = vmatmul.mubr.f32.gmra.mrb[0].mxu0 %v663
        %v857 = vpop.f32.mrb[0].mxu0
        %v858 = vadd.f32 %v753, %v857
        %v859 = vpop.f32.mrb[0].mxu0
        %860 = vmatprep.mubr.f32.mxu0 0.0
        %861 = vmatmul.mubr.f32.gmra.mrb[0].mxu0 %v666
        %v862 = vpop.f32.mrb[0].mxu0
        %v863 = vadd.f32 %v758, %v862
        %v864 = vpop.f32.mrb[0].mxu0
        %865 = vmatprep.mubr.f32.mxu0 0.0
        %866 = vmatmul.mubr.f32.gmra.mrb[0].mxu0 %v669
        %v867 = vpop.f32.mrb[0].mxu0
        %v868 = vadd.f32 %v763, %v867
        %v869 = vpop.f32.mrb[0].mxu0
        %870 = vmatprep.mubr.f32.mxu0 0.0
        %871 = vmatmul.mubr.f32.gmra.mrb[0].mxu0 %v672
        %v872 = vpop.f32.mrb[0].mxu0
        %v873 = vadd.f32 %v768, %v872
        %v874 = vpop.f32.mrb[0].mxu0
        %875 = vmatprep.mubr.f32.mxu0 0.0
        %876 = vmatmul.mubr.f32.gmra.mrb[0].mxu0 %v675
        %v877 = vpop.f32.mrb[0].mxu0
        %v878 = vadd.f32 %v773, %v877
        %v879 = vpop.f32.mrb[0].mxu0
        %880 = vmatprep.mubr.f32.mxu0 0.0
        %881 = vmatmul.mubr.f32.gmra.mrb[0].mxu0 %v678
        %v882 = vpop.f32.mrb[0].mxu0
        %v883 = vadd.f32 %v778, %v882
        %v884 = vpop.f32.mrb[0].mxu0
        %885 = vmatprep.mubr.f32.mxu0 0.0
        %886 = vmatmul.mubr.f32.gmra.mrb[0].mxu0 %v681
        %v887 = vpop.f32.mrb[0].mxu0
        %v888 = vadd.f32 %v783, %v887
        %v889 = vpop.f32.mrb[0].mxu0
        %890 = vmatprep.mubr.f32.mxu0 0.0
        %891 = vmatmul.mubr.f32.gmra.mrb[0].mxu0 %v684
        %v892 = vpop.f32.mrb[0].mxu0
        %v893 = vadd.f32 %v788, %v892
        %v894 = vpop.f32.mrb[0].mxu0
        %895 = vdwg.mxu0
        %v896 = vmax.f32 %v858, 0.0
        %v897 = vmax.f32 %v863, 0.0
        %v898 = vmax.f32 %v868, 0.0
        %v899 = vmax.f32 %v873, 0.0
        %v900 = vmax.f32 %v878, 0.0
        %v901 = vmax.f32 %v883, 0.0
        %v902 = vmax.f32 %v888, 0.0
        %v903 = vmax.f32 %v893, 0.0
        %v904 = vmin.f32 %v896, 6.0
        %v905 = vmin.f32 %v897, 6.0
        %v906 = vmin.f32 %v898, 6.0
        %v907 = vmin.f32 %v899, 6.0
        %v908 = vmin.f32 %v900, 6.0
        %v909 = vmin.f32 %v901, 6.0
        %v910 = vmin.f32 %v902, 6.0
        %v911 = vmin.f32 %v903, 6.0
        %v912 = vld [vmem:[%s4] sm:$0xff]
        %v913 = vld [vmem:[%s4 + $0x8] sm:$0xff]
        %v914 = vld [vmem:[%s4 + $0x10] sm:$0xff]
        %v915 = vld [vmem:[%s4 + $0x18] sm:$0xff]
        %v916 = vld [vmem:[%s5] sm:$0xff]
        %v917 = vld [vmem:[%s5 + $0x8] sm:$0xff]
        %v918 = vld [vmem:[%s5 + $0x10] sm:$0xff]
        %v919 = vld [vmem:[%s5 + $0x18] sm:$0xff]
        %921 = vset.pattern.permute.xlu0 0
        %922 = vperm.xlu0 %921, %v916
        %v923 = vpop.permute.xlu0 %922
        %926 = vset.pattern.permute.xlu0 0
        %927 = vperm.xlu0 %926, %v917
        %v928 = vpop.permute.xlu0 %927
        %931 = vset.pattern.permute.xlu0 0
        %932 = vperm.xlu0 %931, %v918
        %v933 = vpop.permute.xlu0 %932
        %936 = vset.pattern.permute.xlu0 0
        %937 = vperm.xlu0 %936, %v919
        %v938 = vpop.permute.xlu0 %937
        %vm940 = vcmask 523264
        %v942 = vsel %vm940, %v912, 0
        %v945 = vsel %vm940, %v913, 0
        %v948 = vsel %vm940, %v914, 0
        %v951 = vsel %vm940, %v915, 0
        %953 = vmatprep.subr.mxu0 0.0
        %954 = vmatpush1.msra.mxu0 %v904
        %955 = vmatprep.subr.mxu0 0.0
        %956 = vmatpush1.msra.mxu0 %v905
        %957 = vmatprep.subr.mxu0 0.0
        %958 = vmatpush1.msra.mxu0 %v906
        %959 = vmatprep.subr.mxu0 0.0
        %960 = vmatpush1.msra.mxu0 %v907
        %961 = vmatprep.subr.mxu0 0.0
        %962 = vmatpush1.msra.mxu0 %v908
        %963 = vmatprep.subr.mxu0 0.0
        %964 = vmatpush1.msra.mxu0 %v909
        %965 = vmatprep.subr.mxu0 0.0
        %966 = vmatpush1.msra.mxu0 %v910
        %967 = vmatprep.subr.mxu0 0.0
        %968 = vmatpush1.msra.mxu0 %v911
        %969 = vmatprep.subr.mxu0 0.0
        %970 = vmatpush1.msra.mxu0 0.0
        %971 = vmatprep.subr.mxu0 0.0
        %972 = vmatpush1.msra.mxu0 0.0
        %973 = vmatprep.subr.mxu0 0.0
        %974 = vmatpush1.msra.mxu0 0.0
        %975 = vmatprep.subr.mxu0 0.0
        %976 = vmatpush1.msra.mxu0 0.0
        %977 = vmatprep.subr.mxu0 0.0
        %978 = vmatpush1.msra.mxu0 0.0
        %979 = vmatprep.subr.mxu0 0.0
        %980 = vmatpush1.msra.mxu0 0.0
        %981 = vmatprep.subr.mxu0 0.0
        %982 = vmatpush1.msra.mxu0 0.0
        %983 = vmatprep.subr.mxu0 0.0
        %984 = vmatpush1.msra.mxu0 0.0
        %985 = vmatprep.subr.mxu0 0.0
        %986 = vmatpush1.msra.mxu0 0.0
        %987 = vmatprep.subr.mxu0 0.0
        %988 = vmatpush1.msra.mxu0 0.0
        %989 = vmatprep.subr.mxu0 0.0
        %990 = vmatpush1.msra.mxu0 0.0
        %991 = vmatprep.subr.mxu0 0.0
        %992 = vmatpush1.msra.mxu0 0.0
        %993 = vmatprep.subr.mxu0 0.0
        %994 = vmatpush1.msra.mxu0 0.0
        %995 = vmatprep.subr.mxu0 0.0
        %996 = vmatpush1.msra.mxu0 0.0
        %997 = vmatprep.subr.mxu0 0.0
        %998 = vmatpush1.msra.mxu0 0.0
        %999 = vmatprep.subr.mxu0 0.0
        %1000 = vmatpush1.msra.mxu0 0.0
        %1001 = vmatprep.subr.mxu0 0.0
        %1002 = vmatpush1.msra.mxu0 0.0
        %1003 = vmatprep.subr.mxu0 0.0
        %1004 = vmatpush1.msra.mxu0 0.0
        %1005 = vmatprep.subr.mxu0 0.0
        %1006 = vmatpush1.msra.mxu0 0.0
        %1007 = vmatprep.subr.mxu0 0.0
        %1008 = vmatpush1.msra.mxu0 0.0
        %1009 = vmatprep.subr.mxu0 0.0
        %1010 = vmatpush1.msra.mxu0 0.0
        %1011 = vmatprep.subr.mxu0 0.0
        %1012 = vmatpush1.msra.mxu0 0.0
        %1013 = vmatprep.subr.mxu0 0.0
        %1014 = vmatpush1.msra.mxu0 0.0
        %1015 = vmatprep.subr.mxu0 0.0
        %1016 = vmatpush1.msra.mxu0 0.0
        %1017 = vmatprep.mubr.f32.mxu0 0.0
        %1018 = vmatmul.mubr.f32.gmra.mrb[0].mxu0 %v942
        %v1019 = vpop.f32.mrb[0].mxu0
        %v1020 = vadd.f32 %v923, %v1019
        %v1021 = vpop.f32.mrb[0].mxu0
        %1022 = vmatprep.mubr.f32.mxu0 0.0
        %1023 = vmatmul.mubr.f32.gmra.mrb[0].mxu0 %v945
        %v1024 = vpop.f32.mrb[0].mxu0
        %v1025 = vadd.f32 %v928, %v1024
        %v1026 = vpop.f32.mrb[0].mxu0
        %1027 = vmatprep.mubr.f32.mxu0 0.0
        %1028 = vmatmul.mubr.f32.gmra.mrb[0].mxu0 %v948
        %v1029 = vpop.f32.mrb[0].mxu0
        %v1030 = vadd.f32 %v933, %v1029
        %v1031 = vpop.f32.mrb[0].mxu0
        %1032 = vmatprep.mubr.f32.mxu0 0.0
        %1033 = vmatmul.mubr.f32.gmra.mrb[0].mxu0 %v951
        %v1034 = vpop.f32.mrb[0].mxu0
        %v1035 = vadd.f32 %v938, %v1034
        %v1036 = vpop.f32.mrb[0].mxu0
        %1037 = vdwg.mxu0
        %v1038 = vmax.f32 %v1020, 0.0
        %v1039 = vmax.f32 %v1025, 0.0
        %v1040 = vmax.f32 %v1030, 0.0
        %v1041 = vmax.f32 %v1035, 0.0
        %v1042 = vmin.f32 %v1038, 6.0
        %v1043 = vmin.f32 %v1039, 6.0
        %v1044 = vmin.f32 %v1040, 6.0
        %v1045 = vmin.f32 %v1041, 6.0
        %s1046 = sadd.s32 %s382, %s546
        %s1047 = ssub.s32 %s1046, 2
        %p1048 = scmp.ge.s32.totalorder %s1047, 0
        %p1049 = scmp.lt.s32.totalorder %s1047, 16
        %p1050 = pnand %p1048, %p1049
        %p1051 = pneg %p1050
        %s1052 = scalar_select %p1051, 1, 0
        %v1053 = vstv %s1052
        %vm1054 = vcmp.eq.s32.totalorder %v1053, 1
        %v1055 = vsel %vm1054, %v1042, 0.0
        %v1056 = vsel %vm1054, %v1043, 0.0
        %v1057 = vsel %vm1054, %v1044, 0.0
        %v1058 = vsel %vm1054, %v1045, 0.0
        %s1059 = scalar_lea.vmem [#allocation3], %s551
        %1060 = vst.msk [vmem:[%s1059] sm:$0xff] %vm415, %v1055
        %1061 = vst.msk [vmem:[%s1059 + $0x8] sm:$0xff] %vm415, %v1056
        %1062 = vst.msk [vmem:[%s1059 + $0x10] sm:$0xff] %vm415, %v1057
        %1063 = vst.msk [vmem:[%s1059 + $0x18] sm:$0xff] %vm415, %v1058
      $region57: #{srcnn_forward.1} parent=51 // loop_footer
        %s550 = sadd.s32 1, %s546
      $region58: #{srcnn_forward.1} parent=51 // loop_footer_branch
        %545 = sbr.rel target = $region54
      $region59: #{srcnn_forward.1} parent=51 // loop_exit
        _
      loop: start=0, step=1, limit=8
      $region60: #{srcnn_forward.1} parent=51 // loop_pre_header
        _
      $region61: #{srcnn_forward.1} parent=51 // loop_header
        %s1065 = sphi 0, %s1069
        %p1066 = scmp.ge.s32.totalorder %s1065, 8
      $region62: #{srcnn_forward.1} parent=51 // loop_header_branch
        %1068 = sbr.rel (%p1066) target = $region66
      $region63: #{srcnn_forward.1} parent=51 // loop_body
        %s1070 = smul.u32 %s1065, 32
        %s1071 = scalar_lea.vmem [#allocation3], %s1070
        %v1072 = vld [vmem:[%s1071] sm:$0xff]
        %v1073 = vld [vmem:[%s1071 + $0x8] sm:$0xff]
        %v1074 = vld [vmem:[%s1071 + $0x10] sm:$0xff]
        %v1075 = vld [vmem:[%s1071 + $0x18] sm:$0xff]
        %v1076 = vld [vmem:[%s1071 + $0x20] sm:$0xff]
        %v1077 = vld [vmem:[%s1071 + $0x28] sm:$0xff]
        %v1078 = vld [vmem:[%s1071 + $0x30] sm:$0xff]
        %v1079 = vld [vmem:[%s1071 + $0x38] sm:$0xff]
        %v1080 = vld [vmem:[%s1071 + $0x40] sm:$0xff]
        %v1081 = vld [vmem:[%s1071 + $0x48] sm:$0xff]
        %v1082 = vld [vmem:[%s1071 + $0x50] sm:$0xff]
        %v1083 = vld [vmem:[%s1071 + $0x58] sm:$0xff]
        %v1084 = vld [vmem:[%s1071 + $0x60] sm:$0xff]
        %v1085 = vld [vmem:[%s1071 + $0x68] sm:$0xff]
        %v1086 = vld [vmem:[%s1071 + $0x70] sm:$0xff]
        %v1087 = vld [vmem:[%s1071 + $0x78] sm:$0xff]
        %v1088 = vld [vmem:[%s1071 + $0x80] sm:$0xff]
        %v1089 = vld [vmem:[%s1071 + $0x88] sm:$0xff]
        %v1090 = vld [vmem:[%s1071 + $0x90] sm:$0xff]
        %v1091 = vld [vmem:[%s1071 + $0x98] sm:$0xff]
        %v1092 = vld [vmem:[%s6] sm:$0x77]
        %v1094 = vcombine.high %v1092, %v1092
        %vm1095 = vcmask 261120
        %v1096 = vsel %vm1095, %v1094, 0
        %1098 = vmatprep.subr.mxu0 0.0
        %1099 = vmatpush1.msra.mxu0 %v1072
        %1100 = vmatprep.subr.mxu0 0.0
        %1101 = vmatpush1.msra.mxu0 %v1073
        %1102 = vmatprep.subr.mxu0 0.0
        %1103 = vmatpush1.msra.mxu0 %v1074
        %1104 = vmatprep.subr.mxu0 0.0
        %1105 = vmatpush1.msra.mxu0 %v1075
        %1106 = vmatprep.subr.mxu0 0.0
        %1107 = vmatpush1.msra.mxu0 %v1076
        %1108 = vmatprep.subr.mxu0 0.0
        %1109 = vmatpush1.msra.mxu0 %v1077
        %1110 = vmatprep.subr.mxu0 0.0
        %1111 = vmatpush1.msra.mxu0 %v1078
        %1112 = vmatprep.subr.mxu0 0.0
        %1113 = vmatpush1.msra.mxu0 %v1079
        %1114 = vmatprep.subr.mxu0 0.0
        %1115 = vmatpush1.msra.mxu0 %v1080
        %1116 = vmatprep.subr.mxu0 0.0
        %1117 = vmatpush1.msra.mxu0 %v1081
        %1118 = vmatprep.subr.mxu0 0.0
        %1119 = vmatpush1.msra.mxu0 %v1082
        %1120 = vmatprep.subr.mxu0 0.0
        %1121 = vmatpush1.msra.mxu0 %v1083
        %1122 = vmatprep.subr.mxu0 0.0
        %1123 = vmatpush1.msra.mxu0 %v1084
        %1124 = vmatprep.subr.mxu0 0.0
        %1125 = vmatpush1.msra.mxu0 %v1085
        %1126 = vmatprep.subr.mxu0 0.0
        %1127 = vmatpush1.msra.mxu0 %v1086
        %1128 = vmatprep.subr.mxu0 0.0
        %1129 = vmatpush1.msra.mxu0 %v1087
        %1130 = vmatprep.subr.mxu0 0.0
        %1131 = vmatpush1.msra.mxu0 %v1088
        %1132 = vmatprep.subr.mxu0 0.0
        %1133 = vmatpush1.msra.mxu0 %v1089
        %1134 = vmatprep.subr.mxu0 0.0
        %1135 = vmatpush1.msra.mxu0 %v1090
        %1136 = vmatprep.subr.mxu0 0.0
        %1137 = vmatpush1.msra.mxu0 %v1091
        %1138 = vmatprep.subr.mxu0 0.0
        %1139 = vmatpush1.msra.mxu0 0.0
        %1140 = vmatprep.subr.mxu0 0.0
        %1141 = vmatpush1.msra.mxu0 0.0
        %1142 = vmatprep.subr.mxu0 0.0
        %1143 = vmatpush1.msra.mxu0 0.0
        %1144 = vmatprep.subr.mxu0 0.0
        %1145 = vmatpush1.msra.mxu0 0.0
        %1146 = vmatprep.subr.mxu0 0.0
        %1147 = vmatpush1.msra.mxu0 0.0
        %1148 = vmatprep.subr.mxu0 0.0
        %1149 = vmatpush1.msra.mxu0 0.0
        %1150 = vmatprep.subr.mxu0 0.0
        %1151 = vmatpush1.msra.mxu0 0.0
        %1152 = vmatprep.subr.mxu0 0.0
        %1153 = vmatpush1.msra.mxu0 0.0
        %1154 = vmatprep.subr.mxu0 0.0
        %1155 = vmatpush1.msra.mxu0 0.0
        %1156 = vmatprep.subr.mxu0 0.0
        %1157 = vmatpush1.msra.mxu0 0.0
        %1158 = vmatprep.subr.mxu0 0.0
        %1159 = vmatpush1.msra.mxu0 0.0
        %1160 = vmatprep.subr.mxu0 0.0
        %1161 = vmatpush1.msra.mxu0 0.0
        %1162 = vmatprep.mubr.f32.mxu0 %v1096
        %1163 = vmatmul.mubr.f32.gmra.mrb[0].mxu0 %v1092
        %v1164 = vpop.f32.mrb[0].mxu0
        %v1165 = vadd.f32 0.0, %v1164
        %v1166 = vpop.f32.mrb[0].mxu0
        %1167 = vdwg.mxu0
        %1169 = vrot.lane.b32.xlu0 %v1165, 2
        %v1170 = vpop.permute.xlu0 %1169
        %vm1172 = vcmask 15360
        %v1173 = vsel %vm1172, 0.0, %v1170
        %vm1174 = vcmask 146432
        %v1175 = vsel %vm1174, %v1173, 0.0
        %v1176 = vadd.f32 %v1175, 0.0
        %s1177 = scalar_lea.vmem %s6, 8
        %v1178 = vld [vmem:[%s1177] sm:$0x77]
        %v1180 = vcombine.high %v1178, %v1178
        %v1181 = vsel %vm1095, %v1180, 0
        %1183 = vmatprep.subr.mxu0 0.0
        %1184 = vmatpush1.msra.mxu0 %v1072
        %1185 = vmatprep.subr.mxu0 0.0
        %1186 = vmatpush1.msra.mxu0 %v1073
        %1187 = vmatprep.subr.mxu0 0.0
        %1188 = vmatpush1.msra.mxu0 %v1074
        %1189 = vmatprep.subr.mxu0 0.0
        %1190 = vmatpush1.msra.mxu0 %v1075
        %1191 = vmatprep.subr.mxu0 0.0
        %1192 = vmatpush1.msra.mxu0 %v1076
        %1193 = vmatprep.subr.mxu0 0.0
        %1194 = vmatpush1.msra.mxu0 %v1077
        %1195 = vmatprep.subr.mxu0 0.0
        %1196 = vmatpush1.msra.mxu0 %v1078
        %1197 = vmatprep.subr.mxu0 0.0
        %1198 = vmatpush1.msra.mxu0 %v1079
        %1199 = vmatprep.subr.mxu0 0.0
        %1200 = vmatpush1.msra.mxu0 %v1080
        %1201 = vmatprep.subr.mxu0 0.0
        %1202 = vmatpush1.msra.mxu0 %v1081
        %1203 = vmatprep.subr.mxu0 0.0
        %1204 = vmatpush1.msra.mxu0 %v1082
        %1205 = vmatprep.subr.mxu0 0.0
        %1206 = vmatpush1.msra.mxu0 %v1083
        %1207 = vmatprep.subr.mxu0 0.0
        %1208 = vmatpush1.msra.mxu0 %v1084
        %1209 = vmatprep.subr.mxu0 0.0
        %1210 = vmatpush1.msra.mxu0 %v1085
        %1211 = vmatprep.subr.mxu0 0.0
        %1212 = vmatpush1.msra.mxu0 %v1086
        %1213 = vmatprep.subr.mxu0 0.0
        %1214 = vmatpush1.msra.mxu0 %v1087
        %1215 = vmatprep.subr.mxu0 0.0
        %1216 = vmatpush1.msra.mxu0 %v1088
        %1217 = vmatprep.subr.mxu0 0.0
        %1218 = vmatpush1.msra.mxu0 %v1089
        %1219 = vmatprep.subr.mxu0 0.0
        %1220 = vmatpush1.msra.mxu0 %v1090
        %1221 = vmatprep.subr.mxu0 0.0
        %1222 = vmatpush1.msra.mxu0 %v1091
        %1223 = vmatprep.subr.mxu0 0.0
        %1224 = vmatpush1.msra.mxu0 0.0
        %1225 = vmatprep.subr.mxu0 0.0
        %1226 = vmatpush1.msra.mxu0 0.0
        %1227 = vmatprep.subr.mxu0 0.0
        %1228 = vmatpush1.msra.mxu0 0.0
        %1229 = vmatprep.subr.mxu0 0.0
        %1230 = vmatpush1.msra.mxu0 0.0
        %1231 = vmatprep.subr.mxu0 0.0
        %1232 = vmatpush1.msra.mxu0 0.0
        %1233 = vmatprep.subr.mxu0 0.0
        %1234 = vmatpush1.msra.mxu0 0.0
        %1235 = vmatprep.subr.mxu0 0.0
        %1236 = vmatpush1.msra.mxu0 0.0
        %1237 = vmatprep.subr.mxu0 0.0
        %1238 = vmatpush1.msra.mxu0 0.0
        %1239 = vmatprep.subr.mxu0 0.0
        %1240 = vmatpush1.msra.mxu0 0.0
        %1241 = vmatprep.subr.mxu0 0.0
        %1242 = vmatpush1.msra.mxu0 0.0
        %1243 = vmatprep.subr.mxu0 0.0
        %1244 = vmatpush1.msra.mxu0 0.0
        %1245 = vmatprep.subr.mxu0 0.0
        %1246 = vmatpush1.msra.mxu0 0.0
        %1247 = vmatprep.mubr.f32.mxu0 %v1181
        %1248 = vmatmul.mubr.f32.gmra.mrb[0].mxu0 %v1178
        %v1249 = vpop.f32.mrb[0].mxu0
        %v1250 = vadd.f32 0.0, %v1249
        %v1251 = vpop.f32.mrb[0].mxu0
        %1252 = vdwg.mxu0
        %1254 = vrot.lane.b32.xlu0 %v1250, 2
        %v1255 = vpop.permute.xlu0 %1254
        %v1257 = vsel %vm1172, 0.0, %v1255
        %v1258 = vsel %vm1174, %v1257, 0.0
        %1260 = vrot.lane.b32.xlu0 %v1258, 127
        %v1261 = vpop.permute.xlu0 %1260
        %v1263 = vadd.f32 %v1176, %v1261
        %s1264 = scalar_lea.vmem %s6, 16
        %v1265 = vld [vmem:[%s1264] sm:$0x77]
        %v1267 = vcombine.high %v1265, %v1265
        %v1268 = vsel %vm1095, %v1267, 0
        %1270 = vmatprep.subr.mxu0 0.0
        %1271 = vmatpush1.msra.mxu0 %v1072
        %1272 = vmatprep.subr.mxu0 0.0
        %1273 = vmatpush1.msra.mxu0 %v1073
        %1274 = vmatprep.subr.mxu0 0.0
        %1275 = vmatpush1.msra.mxu0 %v1074
        %1276 = vmatprep.subr.mxu0 0.0
        %1277 = vmatpush1.msra.mxu0 %v1075
        %1278 = vmatprep.subr.mxu0 0.0
        %1279 = vmatpush1.msra.mxu0 %v1076
        %1280 = vmatprep.subr.mxu0 0.0
        %1281 = vmatpush1.msra.mxu0 %v1077
        %1282 = vmatprep.subr.mxu0 0.0
        %1283 = vmatpush1.msra.mxu0 %v1078
        %1284 = vmatprep.subr.mxu0 0.0
        %1285 = vmatpush1.msra.mxu0 %v1079
        %1286 = vmatprep.subr.mxu0 0.0
        %1287 = vmatpush1.msra.mxu0 %v1080
        %1288 = vmatprep.subr.mxu0 0.0
        %1289 = vmatpush1.msra.mxu0 %v1081
        %1290 = vmatprep.subr.mxu0 0.0
        %1291 = vmatpush1.msra.mxu0 %v1082
        %1292 = vmatprep.subr.mxu0 0.0
        %1293 = vmatpush1.msra.mxu0 %v1083
        %1294 = vmatprep.subr.mxu0 0.0
        %1295 = vmatpush1.msra.mxu0 %v1084
        %1296 = vmatprep.subr.mxu0 0.0
        %1297 = vmatpush1.msra.mxu0 %v1085
        %1298 = vmatprep.subr.mxu0 0.0
        %1299 = vmatpush1.msra.mxu0 %v1086
        %1300 = vmatprep.subr.mxu0 0.0
        %1301 = vmatpush1.msra.mxu0 %v1087
        %1302 = vmatprep.subr.mxu0 0.0
        %1303 = vmatpush1.msra.mxu0 %v1088
        %1304 = vmatprep.subr.mxu0 0.0
        %1305 = vmatpush1.msra.mxu0 %v1089
        %1306 = vmatprep.subr.mxu0 0.0
        %1307 = vmatpush1.msra.mxu0 %v1090
        %1308 = vmatprep.subr.mxu0 0.0
        %1309 = vmatpush1.msra.mxu0 %v1091
        %1310 = vmatprep.subr.mxu0 0.0
        %1311 = vmatpush1.msra.mxu0 0.0
        %1312 = vmatprep.subr.mxu0 0.0
        %1313 = vmatpush1.msra.mxu0 0.0
        %1314 = vmatprep.subr.mxu0 0.0
        %1315 = vmatpush1.msra.mxu0 0.0
        %1316 = vmatprep.subr.mxu0 0.0
        %1317 = vmatpush1.msra.mxu0 0.0
        %1318 = vmatprep.subr.mxu0 0.0
        %1319 = vmatpush1.msra.mxu0 0.0
        %1320 = vmatprep.subr.mxu0 0.0
        %1321 = vmatpush1.msra.mxu0 0.0
        %1322 = vmatprep.subr.mxu0 0.0
        %1323 = vmatpush1.msra.mxu0 0.0
        %1324 = vmatprep.subr.mxu0 0.0
        %1325 = vmatpush1.msra.mxu0 0.0
        %1326 = vmatprep.subr.mxu0 0.0
        %1327 = vmatpush1.msra.mxu0 0.0
        %1328 = vmatprep.subr.mxu0 0.0
        %1329 = vmatpush1.msra.mxu0 0.0
        %1330 = vmatprep.subr.mxu0 0.0
        %1331 = vmatpush1.msra.mxu0 0.0
        %1332 = vmatprep.subr.mxu0 0.0
        %1333 = vmatpush1.msra.mxu0 0.0
        %1334 = vmatprep.mubr.f32.mxu0 %v1268
        %1335 = vmatmul.mubr.f32.gmra.mrb[0].mxu0 %v1265
        %v1336 = vpop.f32.mrb[0].mxu0
        %v1337 = vadd.f32 0.0, %v1336
        %v1338 = vpop.f32.mrb[0].mxu0
        %1339 = vdwg.mxu0
        %1341 = vrot.lane.b32.xlu0 %v1337, 2
        %v1342 = vpop.permute.xlu0 %1341
        %v1344 = vsel %vm1172, 0.0, %v1342
        %v1345 = vsel %vm1174, %v1344, 0.0
        %1347 = vrot.lane.b32.xlu0 %v1345, 126
        %v1348 = vpop.permute.xlu0 %1347
        %v1350 = vadd.f32 %v1263, %v1348
        %s1351 = scalar_lea.vmem %s6, 24
        %v1352 = vld [vmem:[%s1351] sm:$0x77]
        %v1354 = vcombine.high %v1352, %v1352
        %v1355 = vsel %vm1095, %v1354, 0
        %1357 = vmatprep.subr.mxu0 0.0
        %1358 = vmatpush1.msra.mxu0 %v1072
        %1359 = vmatprep.subr.mxu0 0.0
        %1360 = vmatpush1.msra.mxu0 %v1073
        %1361 = vmatprep.subr.mxu0 0.0
        %1362 = vmatpush1.msra.mxu0 %v1074
        %1363 = vmatprep.subr.mxu0 0.0
        %1364 = vmatpush1.msra.mxu0 %v1075
        %1365 = vmatprep.subr.mxu0 0.0
        %1366 = vmatpush1.msra.mxu0 %v1076
        %1367 = vmatprep.subr.mxu0 0.0
        %1368 = vmatpush1.msra.mxu0 %v1077
        %1369 = vmatprep.subr.mxu0 0.0
        %1370 = vmatpush1.msra.mxu0 %v1078
        %1371 = vmatprep.subr.mxu0 0.0
        %1372 = vmatpush1.msra.mxu0 %v1079
        %1373 = vmatprep.subr.mxu0 0.0
        %1374 = vmatpush1.msra.mxu0 %v1080
        %1375 = vmatprep.subr.mxu0 0.0
        %1376 = vmatpush1.msra.mxu0 %v1081
        %1377 = vmatprep.subr.mxu0 0.0
        %1378 = vmatpush1.msra.mxu0 %v1082
        %1379 = vmatprep.subr.mxu0 0.0
        %1380 = vmatpush1.msra.mxu0 %v1083
        %1381 = vmatprep.subr.mxu0 0.0
        %1382 = vmatpush1.msra.mxu0 %v1084
        %1383 = vmatprep.subr.mxu0 0.0
        %1384 = vmatpush1.msra.mxu0 %v1085
        %1385 = vmatprep.subr.mxu0 0.0
        %1386 = vmatpush1.msra.mxu0 %v1086
        %1387 = vmatprep.subr.mxu0 0.0
        %1388 = vmatpush1.msra.mxu0 %v1087
        %1389 = vmatprep.subr.mxu0 0.0
        %1390 = vmatpush1.msra.mxu0 %v1088
        %1391 = vmatprep.subr.mxu0 0.0
        %1392 = vmatpush1.msra.mxu0 %v1089
        %1393 = vmatprep.subr.mxu0 0.0
        %1394 = vmatpush1.msra.mxu0 %v1090
        %1395 = vmatprep.subr.mxu0 0.0
        %1396 = vmatpush1.msra.mxu0 %v1091
        %1397 = vmatprep.subr.mxu0 0.0
        %1398 = vmatpush1.msra.mxu0 0.0
        %1399 = vmatprep.subr.mxu0 0.0
        %1400 = vmatpush1.msra.mxu0 0.0
        %1401 = vmatprep.subr.mxu0 0.0
        %1402 = vmatpush1.msra.mxu0 0.0
        %1403 = vmatprep.subr.mxu0 0.0
        %1404 = vmatpush1.msra.mxu0 0.0
        %1405 = vmatprep.subr.mxu0 0.0
        %1406 = vmatpush1.msra.mxu0 0.0
        %1407 = vmatprep.subr.mxu0 0.0
        %1408 = vmatpush1.msra.mxu0 0.0
        %1409 = vmatprep.subr.mxu0 0.0
        %1410 = vmatpush1.msra.mxu0 0.0
        %1411 = vmatprep.subr.mxu0 0.0
        %1412 = vmatpush1.msra.mxu0 0.0
        %1413 = vmatprep.subr.mxu0 0.0
        %1414 = vmatpush1.msra.mxu0 0.0
        %1415 = vmatprep.subr.mxu0 0.0
        %1416 = vmatpush1.msra.mxu0 0.0
        %1417 = vmatprep.subr.mxu0 0.0
        %1418 = vmatpush1.msra.mxu0 0.0
        %1419 = vmatprep.subr.mxu0 0.0
        %1420 = vmatpush1.msra.mxu0 0.0
        %1421 = vmatprep.mubr.f32.mxu0 %v1355
        %1422 = vmatmul.mubr.f32.gmra.mrb[0].mxu0 %v1352
        %v1423 = vpop.f32.mrb[0].mxu0
        %v1424 = vadd.f32 0.0, %v1423
        %v1425 = vpop.f32.mrb[0].mxu0
        %1426 = vdwg.mxu0
        %1428 = vrot.lane.b32.xlu0 %v1424, 2
        %v1429 = vpop.permute.xlu0 %1428
        %v1431 = vsel %vm1172, 0.0, %v1429
        %v1432 = vsel %vm1174, %v1431, 0.0
        %1434 = vrot.lane.b32.xlu0 %v1432, 125
        %v1435 = vpop.permute.xlu0 %1434
        %v1437 = vadd.f32 %v1350, %v1435
        %s1438 = scalar_lea.vmem %s6, 32
        %v1439 = vld [vmem:[%s1438] sm:$0x77]
        %v1441 = vcombine.high %v1439, %v1439
        %v1442 = vsel %vm1095, %v1441, 0
        %1444 = vmatprep.subr.mxu0 0.0
        %1445 = vmatpush1.msra.mxu0 %v1072
        %1446 = vmatprep.subr.mxu0 0.0
        %1447 = vmatpush1.msra.mxu0 %v1073
        %1448 = vmatprep.subr.mxu0 0.0
        %1449 = vmatpush1.msra.mxu0 %v1074
        %1450 = vmatprep.subr.mxu0 0.0
        %1451 = vmatpush1.msra.mxu0 %v1075
        %1452 = vmatprep.subr.mxu0 0.0
        %1453 = vmatpush1.msra.mxu0 %v1076
        %1454 = vmatprep.subr.mxu0 0.0
        %1455 = vmatpush1.msra.mxu0 %v1077
        %1456 = vmatprep.subr.mxu0 0.0
        %1457 = vmatpush1.msra.mxu0 %v1078
        %1458 = vmatprep.subr.mxu0 0.0
        %1459 = vmatpush1.msra.mxu0 %v1079
        %1460 = vmatprep.subr.mxu0 0.0
        %1461 = vmatpush1.msra.mxu0 %v1080
        %1462 = vmatprep.subr.mxu0 0.0
        %1463 = vmatpush1.msra.mxu0 %v1081
        %1464 = vmatprep.subr.mxu0 0.0
        %1465 = vmatpush1.msra.mxu0 %v1082
        %1466 = vmatprep.subr.mxu0 0.0
        %1467 = vmatpush1.msra.mxu0 %v1083
        %1468 = vmatprep.subr.mxu0 0.0
        %1469 = vmatpush1.msra.mxu0 %v1084
        %1470 = vmatprep.subr.mxu0 0.0
        %1471 = vmatpush1.msra.mxu0 %v1085
        %1472 = vmatprep.subr.mxu0 0.0
        %1473 = vmatpush1.msra.mxu0 %v1086
        %1474 = vmatprep.subr.mxu0 0.0
        %1475 = vmatpush1.msra.mxu0 %v1087
        %1476 = vmatprep.subr.mxu0 0.0
        %1477 = vmatpush1.msra.mxu0 %v1088
        %1478 = vmatprep.subr.mxu0 0.0
        %1479 = vmatpush1.msra.mxu0 %v1089
        %1480 = vmatprep.subr.mxu0 0.0
        %1481 = vmatpush1.msra.mxu0 %v1090
        %1482 = vmatprep.subr.mxu0 0.0
        %1483 = vmatpush1.msra.mxu0 %v1091
        %1484 = vmatprep.subr.mxu0 0.0
        %1485 = vmatpush1.msra.mxu0 0.0
        %1486 = vmatprep.subr.mxu0 0.0
        %1487 = vmatpush1.msra.mxu0 0.0
        %1488 = vmatprep.subr.mxu0 0.0
        %1489 = vmatpush1.msra.mxu0 0.0
        %1490 = vmatprep.subr.mxu0 0.0
        %1491 = vmatpush1.msra.mxu0 0.0
        %1492 = vmatprep.subr.mxu0 0.0
        %1493 = vmatpush1.msra.mxu0 0.0
        %1494 = vmatprep.subr.mxu0 0.0
        %1495 = vmatpush1.msra.mxu0 0.0
        %1496 = vmatprep.subr.mxu0 0.0
        %1497 = vmatpush1.msra.mxu0 0.0
        %1498 = vmatprep.subr.mxu0 0.0
        %1499 = vmatpush1.msra.mxu0 0.0
        %1500 = vmatprep.subr.mxu0 0.0
        %1501 = vmatpush1.msra.mxu0 0.0
        %1502 = vmatprep.subr.mxu0 0.0
        %1503 = vmatpush1.msra.mxu0 0.0
        %1504 = vmatprep.subr.mxu0 0.0
        %1505 = vmatpush1.msra.mxu0 0.0
        %1506 = vmatprep.subr.mxu0 0.0
        %1507 = vmatpush1.msra.mxu0 0.0
        %1508 = vmatprep.mubr.f32.mxu0 %v1442
        %1509 = vmatmul.mubr.f32.gmra.mrb[0].mxu0 %v1439
        %v1510 = vpop.f32.mrb[0].mxu0
        %v1511 = vadd.f32 0.0, %v1510
        %v1512 = vpop.f32.mrb[0].mxu0
        %1513 = vdwg.mxu0
        %1515 = vrot.lane.b32.xlu0 %v1511, 2
        %v1516 = vpop.permute.xlu0 %1515
        %v1518 = vsel %vm1172, 0.0, %v1516
        %v1519 = vsel %vm1174, %v1518, 0.0
        %1521 = vrot.lane.b32.xlu0 %v1519, 124
        %v1522 = vpop.permute.xlu0 %1521
        %v1524 = vadd.f32 %v1437, %v1522
        %v1525 = vld [vmem:[%s7] sm:$0x7]
        %1527 = vset.pattern.permute.xlu0 0
        %1528 = vperm.xlu0 %1527, %v1525
        %v1529 = vpop.permute.xlu0 %1528
        %v1531 = vadd.f32 %v1524, %v1529
        %s1532 = smul.u32 %s1065, 4
        %s1533 = scalar_lea.vmem %s380, %s1532
        %vm1534 = vcmask 124928
        %1535 = vst.msk [vmem:[%s1533] sm:$0x7] %vm1534, %v1531
      $region64: #{srcnn_forward.1} parent=51 // loop_footer
        %s1069 = sadd.s32 1, %s1065
      $region65: #{srcnn_forward.1} parent=51 // loop_footer_branch
        %1064 = sbr.rel target = $region61
      $region66: #{srcnn_forward.1} parent=51 // loop_exit
        _
      %s1536 = smul.u32 8, %s24
      %p1537 = scmp.lt.s32.totalorder %s23, 1
      %s1538 = scalar_select %p1537, %s23, 1
      %p1539 = scmp.lt.s32.totalorder %s1536, 15
      %s1540 = scalar_select %p1539, %s1536, 15
      %s1541 = smul.addr %s1538, 16
      %s1542 = sadd.s32 %s1540, %s1541
      %s1543 = smul.addr %s1542, 4
      %s1544 = scalar_lea.vmem %s8, %s1543
      // Predicated region
      $region67: #{srcnn_forward.1} parent=51 // pred_check
        %p1545 = pneg %p233
      $region68: #{srcnn_forward.1} parent=51 // pred_check_branch
        %1547 = sbr.rel (%p1545) target = $region70
      $region69: #{srcnn_forward.1} parent=51 // pred_region
        %s1548 = smul.u32 8, %s24
      $region70: #{srcnn_forward.1} parent=51 // pred_fallthru
        _
    $region52: #{srcnn_forward.1} parent=5 // pred_fallthru
      _
    %p1549 = scmp.le.s32.totalorder 2, %s14
    // Predicated region
    $region71: #{srcnn_forward.1} parent=5 // pred_check
      %p1550 = pneg %p1549
    $region72: #{srcnn_forward.1} parent=5 // pred_check_branch
      %1552 = sbr.rel (%p1550) target = $region74
    $region73: #{srcnn_forward.1} parent=5 // pred_region
      %s1553 = ssub.s32 %s14, 2
      // Predicated region
      $region75: #{srcnn_forward.1} parent=73 // pred_check
        %p1554 = pneg %p239
      $region76: #{srcnn_forward.1} parent=73 // pred_check_branch
        %1556 = sbr.rel (%p1554) target = $region78
      $region77: #{srcnn_forward.1} parent=73 // pred_region
        %s1557 = smul.u32 8, %s26
        %p1558 = scmp.lt.s32.totalorder %s25, 1
        %s1559 = scalar_select %p1558, %s25, 1
        %p1560 = scmp.lt.s32.totalorder %s1557, 15
        %s1561 = scalar_select %p1560, %s1557, 15
        %s1562 = smul.addr %s1559, 16
        %s1563 = sadd.s32 %s1561, %s1562
        %s1564 = smul.addr %s1563, 4
        %s1565 = scalar_lea.vmem %s8, %s1564
      $region78: #{srcnn_forward.1} parent=73 // pred_fallthru
        _
    $region74: #{srcnn_forward.1} parent=5 // pred_fallthru
      _
  $region6: #{srcnn_forward.1} parent=0 // loop_footer
    %s18 = sadd.s32 1, %s14
  $region7: #{srcnn_forward.1} parent=0 // loop_footer_branch
    %13 = sbr.rel target = $region3
  $region8: #{srcnn_forward.1} parent=0 // loop_exit
    _

</llo_original>
